<compile_context>
chip_gen: v5e
topology: v5e:2x2
jax: 0.10.0
libtpu: 0.0.40
codegen_flags: <defaults>
</compile_context>

<pallas_src>
import functools

import numpy as np

import jax
import jax.numpy as jnp
from jax.experimental import pallas as pl
from jax.experimental.pallas import tpu as pltpu


def cbam_kernel(x_ref, w1t_ref, w2_ref, wsp_ref, colm_ref, rowm_ref, o_ref,
                *, H, W, K):
    """Fused CBAM forward for one batch element.

    x_ref   : (C, H*W)   lane-dense activation block (VMEM)
    w1t_ref : (C, Ch)    first 1x1-conv weight, pre-transposed (Ch = C // ratio)
    w2_ref  : (C, Ch)    second 1x1-conv weight (PyTorch layout)
    wsp_ref : (2*K*K,)   flattened 7x7 spatial-conv weight (SMEM, scalar reads)
    colm_ref: (K, H*W)   column-boundary masks (kw -> valid output lanes)
    rowm_ref: (K, H*W)   row-boundary masks    (kh -> valid output lanes)
    o_ref   : (C, H*W)   output block
    """
    p = K // 2
    HW = H * W
    x = x_ref[...].astype(jnp.float32)                         # (C, HW)

    # ------------- channel attention (exact f32, tiny) ----------------------
    avg_c = jnp.mean(x, axis=1, keepdims=True)                  # (C, 1)
    max_c = jnp.max(x, axis=1, keepdims=True)                   # (C, 1)
    w1t = w1t_ref[...].astype(jnp.float32)                      # (C, Ch)
    w2 = w2_ref[...].astype(jnp.float32)                        # (C, Ch)

    def shared_mlp(v):                                          # v: (C, 1)
        h = jnp.sum(w1t * v, axis=0, keepdims=True)             # (1, Ch)
        h = jnp.maximum(h, 0.0)                                 # ReLU
        return jnp.sum(w2 * h, axis=1, keepdims=True)           # (C, 1)

    ca = jax.nn.sigmoid(shared_mlp(avg_c) + shared_mlp(max_c))  # (C, 1)
    y = x * ca                                                  # lane-broadcast

    # ------------- spatial attention: 7x7 conv in flat lane-dense layout ----
    avg_s = jnp.mean(y, axis=0, keepdims=True)                  # (1, HW)
    max_s = jnp.max(y, axis=0, keepdims=True)                   # (1, HW)

    # Stash y in the output VMEM block: bounds its vreg live range across the
    # conv section (re-read for the final multiply).  Exact for f32 outputs.
    o_ref[...] = y.astype(o_ref.dtype)

    colm = colm_ref[...]                                        # (K, HW)
    rowm = rowm_ref[...]                                        # (K, HW)

    # Hoist the kw (lane) shifts: 2*K masked rolls instead of 2*K*K.
    # cmaps[c][kw][idx] = colmask(kw)[idx] * feat_c[idx + (kw - p)]
    cmaps = []
    for feat in (avg_s, max_s):                                 # conv channel order
        per_kw = []
        for kw in range(K):
            dw = kw - p
            r = feat if dw == 0 else pltpu.roll(feat, shift=(-dw) % HW, axis=1)
            per_kw.append(colm[kw:kw + 1, :] * r)
        cmaps.append(per_kw)

    # Per-kh partial sums are independent 14-term FMA chains; only the final
    # K-term accumulation is chained.  Weights are scalar reads from SMEM.
    acc = jnp.zeros((1, HW), jnp.float32)
    for kh in range(K):
        dh = kh - p
        s_kh = jnp.zeros((1, HW), jnp.float32)
        for c in range(2):
            base = c * K * K + kh * K
            for kw in range(K):
                s_kh = s_kh + wsp_ref[base + kw] * cmaps[c][kw]
        r = s_kh if dh == 0 else pltpu.roll(s_kh, shift=(-dh * W) % HW, axis=1)
        acc = acc + rowm[kh:kh + 1, :] * r
    sa = jax.nn.sigmoid(acc)                                    # (1, HW)

    # Final multiply: sublane-broadcast of sa over C, lane-dense store.
    o_ref[...] = (o_ref[...].astype(jnp.float32) * sa).astype(o_ref.dtype)


def cbam_forward(x, w1, w2, conv_w, kernel_size=7):
    """CBAM forward.

    x      : (B, C, H, W)
    w1     : (C//ratio, C)  ChannelAttention.fc[0] 1x1-conv weight (no bias)
    w2     : (C, C//ratio)  ChannelAttention.fc[2] 1x1-conv weight (no bias)
    conv_w : (1, 2, K, K)   SpatialAttention.conv weight (no bias)
    """
    B, C, H, W = x.shape
    K = kernel_size
    p = K // 2
    HW = H * W
    hidden = w1.shape[0]

    # Free row-major reshape to a lane-dense (B, C, H*W) layout.
    x_flat = x.reshape(B, C, HW)

    # Host-side weight preprocessing (tiny, done once).
    w1t = jnp.asarray(w1, jnp.float32).T                 # (C, hidden)
    w2f = jnp.asarray(w2, jnp.float32)                   # (C, hidden)
    wsp = jnp.asarray(conv_w, jnp.float32).reshape(-1)   # (2*K*K,)

    # Static boundary masks: rowmask(kh) AND colmask(kw) at an output index
    # reproduces Conv2d zero padding when the conv is evaluated as lane rolls
    # of the flattened pooled maps (roll shift = (kh-p)*W + (kw-p)).
    cols = np.arange(HW, dtype=np.int64) % W
    rows = np.arange(HW, dtype=np.int64) // W
    colmask = np.stack(
        [((cols + (kw - p) >= 0) & (cols + (kw - p) < W)) for kw in range(K)]
    ).astype(np.float32)                                  # (K, HW)
    rowmask = np.stack(
        [((rows + (kh - p) >= 0) & (rows + (kh - p) < H)) for kh in range(K)]
    ).astype(np.float32)                                  # (K, HW)
    colmask = jnp.asarray(colmask)
    rowmask = jnp.asarray(rowmask)

    kern = functools.partial(cbam_kernel, H=H, W=W, K=K)

    cost = pl.CostEstimate(
        flops=int(B * (8 * C * HW + 4 * K * K * HW + 8 * C * hidden)),
        transcendentals=int(B * (C + HW)),
        bytes_accessed=int(4 * (2 * B * C * HW + 2 * C * hidden
                                + 2 * K * K + 2 * K * HW)),
    )

    out_flat = pl.pallas_call(
        kern,
        out_shape=jax.ShapeDtypeStruct((B, C, HW), x.dtype),
        grid=(B,),
        in_specs=[
            pl.BlockSpec((pl.Squeezed(), C, HW), lambda b: (b, 0, 0)),
            pl.BlockSpec((C, hidden), lambda b: (0, 0)),
            pl.BlockSpec((C, hidden), lambda b: (0, 0)),
            pl.BlockSpec(memory_space=pltpu.MemorySpace.SMEM),
            pl.BlockSpec((K, HW), lambda b: (0, 0)),
            pl.BlockSpec((K, HW), lambda b: (0, 0)),
        ],
        out_specs=pl.BlockSpec((pl.Squeezed(), C, HW), lambda b: (b, 0, 0)),
        compiler_params=pltpu.CompilerParams(
            dimension_semantics=("parallel",)),
        cost_estimate=cost,
    )(x_flat, w1t, w2f, wsp, colmask, rowmask)

    return out_flat.reshape(B, C, H, W)


def cbam_reference(x, w1, w2, conv_w, kernel_size=7):
    """Pure-JAX reference of the full CBAM forward (f32-accurate)."""
    hp = jax.lax.Precision.HIGHEST

    # Channel attention.
    avg = jnp.mean(x, axis=(2, 3), keepdims=True)
    mx = jnp.max(x, axis=(2, 3), keepdims=True)

    def fc(v):
        h = jnp.einsum("hc,bcij->bhij", w1, v, precision=hp)
        h = jnp.maximum(h, 0.0)
        return jnp.einsum("ch,bhij->bcij", w2, h, precision=hp)

    y = x * jax.nn.sigmoid(fc(avg) + fc(mx))

    # Spatial attention.
    avg_s = jnp.mean(y, axis=1, keepdims=True)
    max_s = jnp.max(y, axis=1, keepdims=True)
    feat = jnp.concatenate([avg_s, max_s], axis=1)
    p = kernel_size // 2
    sa = jax.lax.conv_general_dilated(
        feat, conv_w, window_strides=(1, 1), padding=[(p, p), (p, p)],
        dimension_numbers=("NCHW", "OIHW", "NCHW"), precision=hp)
    return y * jax.nn.sigmoid(sa)


if __name__ == "__main__":
    B, C, H, W = 2, 32, 16, 16
    ratio, K = 16, 7
    hidden = C // ratio  # 2

    key = jax.random.PRNGKey(0)
    kx, k1, k2, kc = jax.random.split(key, 4)
    x = jax.random.normal(kx, (B, C, H, W), dtype=jnp.float32)
    # Deterministic synthetic weights matching the nn.Module parameter shapes.
    w1 = 0.3 * jax.random.normal(k1, (hidden, C), dtype=jnp.float32)
    w2 = 0.3 * jax.random.normal(k2, (C, hidden), dtype=jnp.float32)
    conv_w = 0.1 * jax.random.normal(kc, (1, 2, K, K), dtype=jnp.float32)

    out = cbam_forward(x, w1, w2, conv_w, kernel_size=K)
    out = jax.block_until_ready(out)

    ref = cbam_reference(x, w1, w2, conv_w, kernel_size=K)
    assert out.shape == x.shape
    max_err = float(jnp.max(jnp.abs(out - ref)))
    assert jnp.allclose(out, ref, atol=2e-5, rtol=2e-5), (
        f"mismatch vs reference (max abs err {max_err})")

    print("KERNEL_OK")
</pallas_src>

<mosaic_0001>
module attributes {stable_mosaic.version = 11 : i64} {
  func.func @cbam_kernel(%arg0: i32, %arg1: memref<1x32x256xf32, #tpu.memory_space<vmem>>, %arg2: memref<32x2xf32, #tpu.memory_space<vmem>>, %arg3: memref<32x2xf32, #tpu.memory_space<vmem>>, %arg4: memref<98xf32, #tpu.memory_space<smem>>, %arg5: memref<7x256xf32, #tpu.memory_space<vmem>>, %arg6: memref<7x256xf32, #tpu.memory_space<vmem>>, %arg7: memref<1x32x256xf32, #tpu.memory_space<vmem>>) attributes {dimension_semantics = [#tpu.dimension_semantics<parallel>], iteration_bounds = array<i64: 2>, scalar_prefetch = 0 : i64, scratch_operands = 0 : i64, tpu.core_type = #tpu.core_type<tc>, window_params = [{transform_indices = @transform_0, window_bounds = array<i64: 1, 32, 256>}, {pipeline_mode = #tpu.pipeline_mode<synchronous>, transform_indices = @transform_1, window_bounds = array<i64: 32, 2>}, {pipeline_mode = #tpu.pipeline_mode<synchronous>, transform_indices = @transform_2, window_bounds = array<i64: 32, 2>}, {transform_indices = @transform_3, window_bounds = array<i64: 98>}, {pipeline_mode = #tpu.pipeline_mode<synchronous>, transform_indices = @transform_4, window_bounds = array<i64: 7, 256>}, {pipeline_mode = #tpu.pipeline_mode<synchronous>, transform_indices = @transform_5, window_bounds = array<i64: 7, 256>}, {transform_indices = @transform_6, window_bounds = array<i64: 1, 32, 256>}]} {
    %c0 = arith.constant 0 : index
    %c0_0 = arith.constant 0 : index
    %c0_1 = arith.constant 0 : index
    %0 = vector.load %arg1[%c0, %c0_0, %c0_1] : memref<1x32x256xf32, #tpu.memory_space<vmem>>, vector<1x32x256xf32>
    %1 = vector.shape_cast %0 : vector<1x32x256xf32> to vector<32x256xf32>
    %cst = arith.constant dense<0.000000e+00> : vector<32xf32>
    %2 = vector.multi_reduction <add>, %1, %cst [1] : vector<32x256xf32> to vector<32xf32>
    %3 = vector.shape_cast %2 : vector<32xf32> to vector<32x1xf32>
    %cst_2 = arith.constant 2.560000e+02 : f32
    %4 = vector.broadcast %cst_2 : f32 to vector<32x1xf32>
    %5 = arith.divf %3, %4 : vector<32x1xf32>
    %cst_3 = arith.constant dense<0xFF800000> : vector<32xf32>
    %6 = vector.multi_reduction <maximumf>, %1, %cst_3 [1] : vector<32x256xf32> to vector<32xf32>
    %7 = vector.shape_cast %6 : vector<32xf32> to vector<32x1xf32>
    %c0_4 = arith.constant 0 : index
    %c0_5 = arith.constant 0 : index
    %8 = vector.load %arg2[%c0_4, %c0_5] : memref<32x2xf32, #tpu.memory_space<vmem>>, vector<32x2xf32>
    %c0_6 = arith.constant 0 : index
    %c0_7 = arith.constant 0 : index
    %9 = vector.load %arg3[%c0_6, %c0_7] : memref<32x2xf32, #tpu.memory_space<vmem>>, vector<32x2xf32>
    %10 = vector.broadcast %5 : vector<32x1xf32> to vector<32x2xf32>
    %11 = arith.mulf %8, %10 : vector<32x2xf32>
    %cst_8 = arith.constant dense<0.000000e+00> : vector<2xf32>
    %12 = vector.multi_reduction <add>, %11, %cst_8 [0] : vector<32x2xf32> to vector<2xf32>
    %13 = vector.shape_cast %12 : vector<2xf32> to vector<1x2xf32>
    %cst_9 = arith.constant 0.000000e+00 : f32
    %14 = vector.broadcast %cst_9 : f32 to vector<1x2xf32>
    %15 = arith.maximumf %13, %14 : vector<1x2xf32>
    %16 = vector.broadcast %15 : vector<1x2xf32> to vector<32x2xf32>
    %17 = arith.mulf %9, %16 : vector<32x2xf32>
    %cst_10 = arith.constant dense<0.000000e+00> : vector<32xf32>
    %18 = vector.multi_reduction <add>, %17, %cst_10 [1] : vector<32x2xf32> to vector<32xf32>
    %19 = vector.shape_cast %18 : vector<32xf32> to vector<32x1xf32>
    %20 = vector.broadcast %7 : vector<32x1xf32> to vector<32x2xf32>
    %21 = arith.mulf %8, %20 : vector<32x2xf32>
    %cst_11 = arith.constant dense<0.000000e+00> : vector<2xf32>
    %22 = vector.multi_reduction <add>, %21, %cst_11 [0] : vector<32x2xf32> to vector<2xf32>
    %23 = vector.shape_cast %22 : vector<2xf32> to vector<1x2xf32>
    %cst_12 = arith.constant 0.000000e+00 : f32
    %24 = vector.broadcast %cst_12 : f32 to vector<1x2xf32>
    %25 = arith.maximumf %23, %24 : vector<1x2xf32>
    %26 = vector.broadcast %25 : vector<1x2xf32> to vector<32x2xf32>
    %27 = arith.mulf %9, %26 : vector<32x2xf32>
    %cst_13 = arith.constant dense<0.000000e+00> : vector<32xf32>
    %28 = vector.multi_reduction <add>, %27, %cst_13 [1] : vector<32x2xf32> to vector<32xf32>
    %29 = vector.shape_cast %28 : vector<32xf32> to vector<32x1xf32>
    %30 = arith.addf %19, %29 : vector<32x1xf32>
    %31 = arith.negf %30 : vector<32x1xf32>
    %32 = math.exp %31 : vector<32x1xf32>
    %cst_14 = arith.constant 1.000000e+00 : f32
    %33 = vector.broadcast %cst_14 : f32 to vector<32x1xf32>
    %34 = arith.addf %33, %32 : vector<32x1xf32>
    %35 = arith.divf %33, %34 : vector<32x1xf32>
    %36 = vector.broadcast %35 : vector<32x1xf32> to vector<32x256xf32>
    %37 = arith.mulf %1, %36 : vector<32x256xf32>
    %cst_15 = arith.constant dense<0.000000e+00> : vector<256xf32>
    %38 = vector.multi_reduction <add>, %37, %cst_15 [0] : vector<32x256xf32> to vector<256xf32>
    %39 = vector.shape_cast %38 : vector<256xf32> to vector<1x256xf32>
    %cst_16 = arith.constant 3.200000e+01 : f32
    %40 = vector.broadcast %cst_16 : f32 to vector<1x256xf32>
    %41 = arith.divf %39, %40 : vector<1x256xf32>
    %cst_17 = arith.constant dense<0xFF800000> : vector<256xf32>
    %42 = vector.multi_reduction <maximumf>, %37, %cst_17 [0] : vector<32x256xf32> to vector<256xf32>
    %43 = vector.shape_cast %42 : vector<256xf32> to vector<1x256xf32>
    %c0_18 = arith.constant 0 : index
    %c0_19 = arith.constant 0 : index
    %c0_20 = arith.constant 0 : index
    %44 = vector.load %arg7[%c0_18, %c0_19, %c0_20] : memref<1x32x256xf32, #tpu.memory_space<vmem>>, vector<1x32x256xf32>
    %45 = vector.shape_cast %44 : vector<1x32x256xf32> to vector<32x256xf32>
    %46 = vector.shape_cast %37 : vector<32x256xf32> to vector<1x32x256xf32>
    tpu.vector_store %arg7[%c0_18, %c0_19, %c0_20], %46 {strides = array<i32>} : memref<1x32x256xf32, #tpu.memory_space<vmem>>, vector<1x32x256xf32>,
    %c0_21 = arith.constant 0 : index
    %c0_22 = arith.constant 0 : index
    %47 = vector.load %arg5[%c0_21, %c0_22] : memref<7x256xf32, #tpu.memory_space<vmem>>, vector<7x256xf32>
    %c0_23 = arith.constant 0 : index
    %c0_24 = arith.constant 0 : index
    %48 = vector.load %arg6[%c0_23, %c0_24] : memref<7x256xf32, #tpu.memory_space<vmem>>, vector<7x256xf32>
    %c3_i32 = arith.constant 3 : i32
    %49 = tpu.dynamic_rotate %41 by %c3_i32 dim 1 : vector<1x256xf32>, i32 -> vector<1x256xf32>
    %50 = vector.extract_strided_slice %47 {offsets = [0, 0], sizes = [1, 256], strides = [1, 1]} : vector<7x256xf32> to vector<1x256xf32>
    %51 = arith.mulf %50, %49 : vector<1x256xf32>
    %c2_i32 = arith.constant 2 : i32
    %52 = tpu.dynamic_rotate %41 by %c2_i32 dim 1 : vector<1x256xf32>, i32 -> vector<1x256xf32>
    %53 = vector.extract_strided_slice %47 {offsets = [1, 0], sizes = [1, 256], strides = [1, 1]} : vector<7x256xf32> to vector<1x256xf32>
    %54 = arith.mulf %53, %52 : vector<1x256xf32>
    %c1_i32 = arith.constant 1 : i32
    %55 = tpu.dynamic_rotate %41 by %c1_i32 dim 1 : vector<1x256xf32>, i32 -> vector<1x256xf32>
    %56 = vector.extract_strided_slice %47 {offsets = [2, 0], sizes = [1, 256], strides = [1, 1]} : vector<7x256xf32> to vector<1x256xf32>
    %57 = arith.mulf %56, %55 : vector<1x256xf32>
    %58 = vector.extract_strided_slice %47 {offsets = [3, 0], sizes = [1, 256], strides = [1, 1]} : vector<7x256xf32> to vector<1x256xf32>
    %59 = arith.mulf %58, %41 : vector<1x256xf32>
    %c255_i32 = arith.constant 255 : i32
    %60 = tpu.dynamic_rotate %41 by %c255_i32 dim 1 : vector<1x256xf32>, i32 -> vector<1x256xf32>
    %61 = vector.extract_strided_slice %47 {offsets = [4, 0], sizes = [1, 256], strides = [1, 1]} : vector<7x256xf32> to vector<1x256xf32>
    %62 = arith.mulf %61, %60 : vector<1x256xf32>
    %c254_i32 = arith.constant 254 : i32
    %63 = tpu.dynamic_rotate %41 by %c254_i32 dim 1 : vector<1x256xf32>, i32 -> vector<1x256xf32>
    %64 = vector.extract_strided_slice %47 {offsets = [5, 0], sizes = [1, 256], strides = [1, 1]} : vector<7x256xf32> to vector<1x256xf32>
    %65 = arith.mulf %64, %63 : vector<1x256xf32>
    %c253_i32 = arith.constant 253 : i32
    %66 = tpu.dynamic_rotate %41 by %c253_i32 dim 1 : vector<1x256xf32>, i32 -> vector<1x256xf32>
    %67 = vector.extract_strided_slice %47 {offsets = [6, 0], sizes = [1, 256], strides = [1, 1]} : vector<7x256xf32> to vector<1x256xf32>
    %68 = arith.mulf %67, %66 : vector<1x256xf32>
    %c3_i32_25 = arith.constant 3 : i32
    %69 = tpu.dynamic_rotate %43 by %c3_i32_25 dim 1 : vector<1x256xf32>, i32 -> vector<1x256xf32>
    %70 = vector.extract_strided_slice %47 {offsets = [0, 0], sizes = [1, 256], strides = [1, 1]} : vector<7x256xf32> to vector<1x256xf32>
    %71 = arith.mulf %70, %69 : vector<1x256xf32>
    %c2_i32_26 = arith.constant 2 : i32
    %72 = tpu.dynamic_rotate %43 by %c2_i32_26 dim 1 : vector<1x256xf32>, i32 -> vector<1x256xf32>
    %73 = vector.extract_strided_slice %47 {offsets = [1, 0], sizes = [1, 256], strides = [1, 1]} : vector<7x256xf32> to vector<1x256xf32>
    %74 = arith.mulf %73, %72 : vector<1x256xf32>
    %c1_i32_27 = arith.constant 1 : i32
    %75 = tpu.dynamic_rotate %43 by %c1_i32_27 dim 1 : vector<1x256xf32>, i32 -> vector<1x256xf32>
    %76 = vector.extract_strided_slice %47 {offsets = [2, 0], sizes = [1, 256], strides = [1, 1]} : vector<7x256xf32> to vector<1x256xf32>
    %77 = arith.mulf %76, %75 : vector<1x256xf32>
    %78 = vector.extract_strided_slice %47 {offsets = [3, 0], sizes = [1, 256], strides = [1, 1]} : vector<7x256xf32> to vector<1x256xf32>
    %79 = arith.mulf %78, %43 : vector<1x256xf32>
    %c255_i32_28 = arith.constant 255 : i32
    %80 = tpu.dynamic_rotate %43 by %c255_i32_28 dim 1 : vector<1x256xf32>, i32 -> vector<1x256xf32>
    %81 = vector.extract_strided_slice %47 {offsets = [4, 0], sizes = [1, 256], strides = [1, 1]} : vector<7x256xf32> to vector<1x256xf32>
    %82 = arith.mulf %81, %80 : vector<1x256xf32>
    %c254_i32_29 = arith.constant 254 : i32
    %83 = tpu.dynamic_rotate %43 by %c254_i32_29 dim 1 : vector<1x256xf32>, i32 -> vector<1x256xf32>
    %84 = vector.extract_strided_slice %47 {offsets = [5, 0], sizes = [1, 256], strides = [1, 1]} : vector<7x256xf32> to vector<1x256xf32>
    %85 = arith.mulf %84, %83 : vector<1x256xf32>
    %c253_i32_30 = arith.constant 253 : i32
    %86 = tpu.dynamic_rotate %43 by %c253_i32_30 dim 1 : vector<1x256xf32>, i32 -> vector<1x256xf32>
    %87 = vector.extract_strided_slice %47 {offsets = [6, 0], sizes = [1, 256], strides = [1, 1]} : vector<7x256xf32> to vector<1x256xf32>
    %88 = arith.mulf %87, %86 : vector<1x256xf32>
    %cst_31 = arith.constant 0.000000e+00 : f32
    %89 = vector.broadcast %cst_31 : f32 to vector<1x256xf32>
    %cst_32 = arith.constant 0.000000e+00 : f32
    %90 = vector.broadcast %cst_32 : f32 to vector<1x256xf32>
    %c0_33 = arith.constant 0 : index
    %91 = memref.load %arg4[%c0_33] : memref<98xf32, #tpu.memory_space<smem>>
    %92 = vector.broadcast %91 : f32 to vector<1x256xf32>
    %93 = arith.mulf %92, %51 : vector<1x256xf32>
    %94 = arith.addf %90, %93 : vector<1x256xf32>
    %c1 = arith.constant 1 : index
    %95 = memref.load %arg4[%c1] : memref<98xf32, #tpu.memory_space<smem>>
    %96 = vector.broadcast %95 : f32 to vector<1x256xf32>
    %97 = arith.mulf %96, %54 : vector<1x256xf32>
    %98 = arith.addf %94, %97 : vector<1x256xf32>
    %c2 = arith.constant 2 : index
    %99 = memref.load %arg4[%c2] : memref<98xf32, #tpu.memory_space<smem>>
    %100 = vector.broadcast %99 : f32 to vector<1x256xf32>
    %101 = arith.mulf %100, %57 : vector<1x256xf32>
    %102 = arith.addf %98, %101 : vector<1x256xf32>
    %c3 = arith.constant 3 : index
    %103 = memref.load %arg4[%c3] : memref<98xf32, #tpu.memory_space<smem>>
    %104 = vector.broadcast %103 : f32 to vector<1x256xf32>
    %105 = arith.mulf %104, %59 : vector<1x256xf32>
    %106 = arith.addf %102, %105 : vector<1x256xf32>
    %c4 = arith.constant 4 : index
    %107 = memref.load %arg4[%c4] : memref<98xf32, #tpu.memory_space<smem>>
    %108 = vector.broadcast %107 : f32 to vector<1x256xf32>
    %109 = arith.mulf %108, %62 : vector<1x256xf32>
    %110 = arith.addf %106, %109 : vector<1x256xf32>
    %c5 = arith.constant 5 : index
    %111 = memref.load %arg4[%c5] : memref<98xf32, #tpu.memory_space<smem>>
    %112 = vector.broadcast %111 : f32 to vector<1x256xf32>
    %113 = arith.mulf %112, %65 : vector<1x256xf32>
    %114 = arith.addf %110, %113 : vector<1x256xf32>
    %c6 = arith.constant 6 : index
    %115 = memref.load %arg4[%c6] : memref<98xf32, #tpu.memory_space<smem>>
    %116 = vector.broadcast %115 : f32 to vector<1x256xf32>
    %117 = arith.mulf %116, %68 : vector<1x256xf32>
    %118 = arith.addf %114, %117 : vector<1x256xf32>
    %c49 = arith.constant 49 : index
    %119 = memref.load %arg4[%c49] : memref<98xf32, #tpu.memory_space<smem>>
    %120 = vector.broadcast %119 : f32 to vector<1x256xf32>
    %121 = arith.mulf %120, %71 : vector<1x256xf32>
    %122 = arith.addf %118, %121 : vector<1x256xf32>
    %c50 = arith.constant 50 : index
    %123 = memref.load %arg4[%c50] : memref<98xf32, #tpu.memory_space<smem>>
    %124 = vector.broadcast %123 : f32 to vector<1x256xf32>
    %125 = arith.mulf %124, %74 : vector<1x256xf32>
    %126 = arith.addf %122, %125 : vector<1x256xf32>
    %c51 = arith.constant 51 : index
    %127 = memref.load %arg4[%c51] : memref<98xf32, #tpu.memory_space<smem>>
    %128 = vector.broadcast %127 : f32 to vector<1x256xf32>
    %129 = arith.mulf %128, %77 : vector<1x256xf32>
    %130 = arith.addf %126, %129 : vector<1x256xf32>
    %c52 = arith.constant 52 : index
    %131 = memref.load %arg4[%c52] : memref<98xf32, #tpu.memory_space<smem>>
    %132 = vector.broadcast %131 : f32 to vector<1x256xf32>
    %133 = arith.mulf %132, %79 : vector<1x256xf32>
    %134 = arith.addf %130, %133 : vector<1x256xf32>
    %c53 = arith.constant 53 : index
    %135 = memref.load %arg4[%c53] : memref<98xf32, #tpu.memory_space<smem>>
    %136 = vector.broadcast %135 : f32 to vector<1x256xf32>
    %137 = arith.mulf %136, %82 : vector<1x256xf32>
    %138 = arith.addf %134, %137 : vector<1x256xf32>
    %c54 = arith.constant 54 : index
    %139 = memref.load %arg4[%c54] : memref<98xf32, #tpu.memory_space<smem>>
    %140 = vector.broadcast %139 : f32 to vector<1x256xf32>
    %141 = arith.mulf %140, %85 : vector<1x256xf32>
    %142 = arith.addf %138, %141 : vector<1x256xf32>
    %c55 = arith.constant 55 : index
    %143 = memref.load %arg4[%c55] : memref<98xf32, #tpu.memory_space<smem>>
    %144 = vector.broadcast %143 : f32 to vector<1x256xf32>
    %145 = arith.mulf %144, %88 : vector<1x256xf32>
    %146 = arith.addf %142, %145 : vector<1x256xf32>
    %c48_i32 = arith.constant 48 : i32
    %147 = tpu.dynamic_rotate %146 by %c48_i32 dim 1 : vector<1x256xf32>, i32 -> vector<1x256xf32>
    %148 = vector.extract_strided_slice %48 {offsets = [0, 0], sizes = [1, 256], strides = [1, 1]} : vector<7x256xf32> to vector<1x256xf32>
    %149 = arith.mulf %148, %147 : vector<1x256xf32>
    %150 = arith.addf %89, %149 : vector<1x256xf32>
    %cst_34 = arith.constant 0.000000e+00 : f32
    %151 = vector.broadcast %cst_34 : f32 to vector<1x256xf32>
    %c7 = arith.constant 7 : index
    %152 = memref.load %arg4[%c7] : memref<98xf32, #tpu.memory_space<smem>>
    %153 = vector.broadcast %152 : f32 to vector<1x256xf32>
    %154 = arith.mulf %153, %51 : vector<1x256xf32>
    %155 = arith.addf %151, %154 : vector<1x256xf32>
    %c8 = arith.constant 8 : index
    %156 = memref.load %arg4[%c8] : memref<98xf32, #tpu.memory_space<smem>>
    %157 = vector.broadcast %156 : f32 to vector<1x256xf32>
    %158 = arith.mulf %157, %54 : vector<1x256xf32>
    %159 = arith.addf %155, %158 : vector<1x256xf32>
    %c9 = arith.constant 9 : index
    %160 = memref.load %arg4[%c9] : memref<98xf32, #tpu.memory_space<smem>>
    %161 = vector.broadcast %160 : f32 to vector<1x256xf32>
    %162 = arith.mulf %161, %57 : vector<1x256xf32>
    %163 = arith.addf %159, %162 : vector<1x256xf32>
    %c10 = arith.constant 10 : index
    %164 = memref.load %arg4[%c10] : memref<98xf32, #tpu.memory_space<smem>>
    %165 = vector.broadcast %164 : f32 to vector<1x256xf32>
    %166 = arith.mulf %165, %59 : vector<1x256xf32>
    %167 = arith.addf %163, %166 : vector<1x256xf32>
    %c11 = arith.constant 11 : index
    %168 = memref.load %arg4[%c11] : memref<98xf32, #tpu.memory_space<smem>>
    %169 = vector.broadcast %168 : f32 to vector<1x256xf32>
    %170 = arith.mulf %169, %62 : vector<1x256xf32>
    %171 = arith.addf %167, %170 : vector<1x256xf32>
    %c12 = arith.constant 12 : index
    %172 = memref.load %arg4[%c12] : memref<98xf32, #tpu.memory_space<smem>>
    %173 = vector.broadcast %172 : f32 to vector<1x256xf32>
    %174 = arith.mulf %173, %65 : vector<1x256xf32>
    %175 = arith.addf %171, %174 : vector<1x256xf32>
    %c13 = arith.constant 13 : index
    %176 = memref.load %arg4[%c13] : memref<98xf32, #tpu.memory_space<smem>>
    %177 = vector.broadcast %176 : f32 to vector<1x256xf32>
    %178 = arith.mulf %177, %68 : vector<1x256xf32>
    %179 = arith.addf %175, %178 : vector<1x256xf32>
    %c56 = arith.constant 56 : index
    %180 = memref.load %arg4[%c56] : memref<98xf32, #tpu.memory_space<smem>>
    %181 = vector.broadcast %180 : f32 to vector<1x256xf32>
    %182 = arith.mulf %181, %71 : vector<1x256xf32>
    %183 = arith.addf %179, %182 : vector<1x256xf32>
    %c57 = arith.constant 57 : index
    %184 = memref.load %arg4[%c57] : memref<98xf32, #tpu.memory_space<smem>>
    %185 = vector.broadcast %184 : f32 to vector<1x256xf32>
    %186 = arith.mulf %185, %74 : vector<1x256xf32>
    %187 = arith.addf %183, %186 : vector<1x256xf32>
    %c58 = arith.constant 58 : index
    %188 = memref.load %arg4[%c58] : memref<98xf32, #tpu.memory_space<smem>>
    %189 = vector.broadcast %188 : f32 to vector<1x256xf32>
    %190 = arith.mulf %189, %77 : vector<1x256xf32>
    %191 = arith.addf %187, %190 : vector<1x256xf32>
    %c59 = arith.constant 59 : index
    %192 = memref.load %arg4[%c59] : memref<98xf32, #tpu.memory_space<smem>>
    %193 = vector.broadcast %192 : f32 to vector<1x256xf32>
    %194 = arith.mulf %193, %79 : vector<1x256xf32>
    %195 = arith.addf %191, %194 : vector<1x256xf32>
    %c60 = arith.constant 60 : index
    %196 = memref.load %arg4[%c60] : memref<98xf32, #tpu.memory_space<smem>>
    %197 = vector.broadcast %196 : f32 to vector<1x256xf32>
    %198 = arith.mulf %197, %82 : vector<1x256xf32>
    %199 = arith.addf %195, %198 : vector<1x256xf32>
    %c61 = arith.constant 61 : index
    %200 = memref.load %arg4[%c61] : memref<98xf32, #tpu.memory_space<smem>>
    %201 = vector.broadcast %200 : f32 to vector<1x256xf32>
    %202 = arith.mulf %201, %85 : vector<1x256xf32>
    %203 = arith.addf %199, %202 : vector<1x256xf32>
    %c62 = arith.constant 62 : index
    %204 = memref.load %arg4[%c62] : memref<98xf32, #tpu.memory_space<smem>>
    %205 = vector.broadcast %204 : f32 to vector<1x256xf32>
    %206 = arith.mulf %205, %88 : vector<1x256xf32>
    %207 = arith.addf %203, %206 : vector<1x256xf32>
    %c32_i32 = arith.constant 32 : i32
    %208 = tpu.dynamic_rotate %207 by %c32_i32 dim 1 : vector<1x256xf32>, i32 -> vector<1x256xf32>
    %209 = vector.extract_strided_slice %48 {offsets = [1, 0], sizes = [1, 256], strides = [1, 1]} : vector<7x256xf32> to vector<1x256xf32>
    %210 = arith.mulf %209, %208 : vector<1x256xf32>
    %211 = arith.addf %150, %210 : vector<1x256xf32>
    %cst_35 = arith.constant 0.000000e+00 : f32
    %212 = vector.broadcast %cst_35 : f32 to vector<1x256xf32>
    %c14 = arith.constant 14 : index
    %213 = memref.load %arg4[%c14] : memref<98xf32, #tpu.memory_space<smem>>
    %214 = vector.broadcast %213 : f32 to vector<1x256xf32>
    %215 = arith.mulf %214, %51 : vector<1x256xf32>
    %216 = arith.addf %212, %215 : vector<1x256xf32>
    %c15 = arith.constant 15 : index
    %217 = memref.load %arg4[%c15] : memref<98xf32, #tpu.memory_space<smem>>
    %218 = vector.broadcast %217 : f32 to vector<1x256xf32>
    %219 = arith.mulf %218, %54 : vector<1x256xf32>
    %220 = arith.addf %216, %219 : vector<1x256xf32>
    %c16 = arith.constant 16 : index
    %221 = memref.load %arg4[%c16] : memref<98xf32, #tpu.memory_space<smem>>
    %222 = vector.broadcast %221 : f32 to vector<1x256xf32>
    %223 = arith.mulf %222, %57 : vector<1x256xf32>
    %224 = arith.addf %220, %223 : vector<1x256xf32>
    %c17 = arith.constant 17 : index
    %225 = memref.load %arg4[%c17] : memref<98xf32, #tpu.memory_space<smem>>
    %226 = vector.broadcast %225 : f32 to vector<1x256xf32>
    %227 = arith.mulf %226, %59 : vector<1x256xf32>
    %228 = arith.addf %224, %227 : vector<1x256xf32>
    %c18 = arith.constant 18 : index
    %229 = memref.load %arg4[%c18] : memref<98xf32, #tpu.memory_space<smem>>
    %230 = vector.broadcast %229 : f32 to vector<1x256xf32>
    %231 = arith.mulf %230, %62 : vector<1x256xf32>
    %232 = arith.addf %228, %231 : vector<1x256xf32>
    %c19 = arith.constant 19 : index
    %233 = memref.load %arg4[%c19] : memref<98xf32, #tpu.memory_space<smem>>
    %234 = vector.broadcast %233 : f32 to vector<1x256xf32>
    %235 = arith.mulf %234, %65 : vector<1x256xf32>
    %236 = arith.addf %232, %235 : vector<1x256xf32>
    %c20 = arith.constant 20 : index
    %237 = memref.load %arg4[%c20] : memref<98xf32, #tpu.memory_space<smem>>
    %238 = vector.broadcast %237 : f32 to vector<1x256xf32>
    %239 = arith.mulf %238, %68 : vector<1x256xf32>
    %240 = arith.addf %236, %239 : vector<1x256xf32>
    %c63 = arith.constant 63 : index
    %241 = memref.load %arg4[%c63] : memref<98xf32, #tpu.memory_space<smem>>
    %242 = vector.broadcast %241 : f32 to vector<1x256xf32>
    %243 = arith.mulf %242, %71 : vector<1x256xf32>
    %244 = arith.addf %240, %243 : vector<1x256xf32>
    %c64 = arith.constant 64 : index
    %245 = memref.load %arg4[%c64] : memref<98xf32, #tpu.memory_space<smem>>
    %246 = vector.broadcast %245 : f32 to vector<1x256xf32>
    %247 = arith.mulf %246, %74 : vector<1x256xf32>
    %248 = arith.addf %244, %247 : vector<1x256xf32>
    %c65 = arith.constant 65 : index
    %249 = memref.load %arg4[%c65] : memref<98xf32, #tpu.memory_space<smem>>
    %250 = vector.broadcast %249 : f32 to vector<1x256xf32>
    %251 = arith.mulf %250, %77 : vector<1x256xf32>
    %252 = arith.addf %248, %251 : vector<1x256xf32>
    %c66 = arith.constant 66 : index
    %253 = memref.load %arg4[%c66] : memref<98xf32, #tpu.memory_space<smem>>
    %254 = vector.broadcast %253 : f32 to vector<1x256xf32>
    %255 = arith.mulf %254, %79 : vector<1x256xf32>
    %256 = arith.addf %252, %255 : vector<1x256xf32>
    %c67 = arith.constant 67 : index
    %257 = memref.load %arg4[%c67] : memref<98xf32, #tpu.memory_space<smem>>
    %258 = vector.broadcast %257 : f32 to vector<1x256xf32>
    %259 = arith.mulf %258, %82 : vector<1x256xf32>
    %260 = arith.addf %256, %259 : vector<1x256xf32>
    %c68 = arith.constant 68 : index
    %261 = memref.load %arg4[%c68] : memref<98xf32, #tpu.memory_space<smem>>
    %262 = vector.broadcast %261 : f32 to vector<1x256xf32>
    %263 = arith.mulf %262, %85 : vector<1x256xf32>
    %264 = arith.addf %260, %263 : vector<1x256xf32>
    %c69 = arith.constant 69 : index
    %265 = memref.load %arg4[%c69] : memref<98xf32, #tpu.memory_space<smem>>
    %266 = vector.broadcast %265 : f32 to vector<1x256xf32>
    %267 = arith.mulf %266, %88 : vector<1x256xf32>
    %268 = arith.addf %264, %267 : vector<1x256xf32>
    %c16_i32 = arith.constant 16 : i32
    %269 = tpu.dynamic_rotate %268 by %c16_i32 dim 1 : vector<1x256xf32>, i32 -> vector<1x256xf32>
    %270 = vector.extract_strided_slice %48 {offsets = [2, 0], sizes = [1, 256], strides = [1, 1]} : vector<7x256xf32> to vector<1x256xf32>
    %271 = arith.mulf %270, %269 : vector<1x256xf32>
    %272 = arith.addf %211, %271 : vector<1x256xf32>
    %cst_36 = arith.constant 0.000000e+00 : f32
    %273 = vector.broadcast %cst_36 : f32 to vector<1x256xf32>
    %c21 = arith.constant 21 : index
    %274 = memref.load %arg4[%c21] : memref<98xf32, #tpu.memory_space<smem>>
    %275 = vector.broadcast %274 : f32 to vector<1x256xf32>
    %276 = arith.mulf %275, %51 : vector<1x256xf32>
    %277 = arith.addf %273, %276 : vector<1x256xf32>
    %c22 = arith.constant 22 : index
    %278 = memref.load %arg4[%c22] : memref<98xf32, #tpu.memory_space<smem>>
    %279 = vector.broadcast %278 : f32 to vector<1x256xf32>
    %280 = arith.mulf %279, %54 : vector<1x256xf32>
    %281 = arith.addf %277, %280 : vector<1x256xf32>
    %c23 = arith.constant 23 : index
    %282 = memref.load %arg4[%c23] : memref<98xf32, #tpu.memory_space<smem>>
    %283 = vector.broadcast %282 : f32 to vector<1x256xf32>
    %284 = arith.mulf %283, %57 : vector<1x256xf32>
    %285 = arith.addf %281, %284 : vector<1x256xf32>
    %c24 = arith.constant 24 : index
    %286 = memref.load %arg4[%c24] : memref<98xf32, #tpu.memory_space<smem>>
    %287 = vector.broadcast %286 : f32 to vector<1x256xf32>
    %288 = arith.mulf %287, %59 : vector<1x256xf32>
    %289 = arith.addf %285, %288 : vector<1x256xf32>
    %c25 = arith.constant 25 : index
    %290 = memref.load %arg4[%c25] : memref<98xf32, #tpu.memory_space<smem>>
    %291 = vector.broadcast %290 : f32 to vector<1x256xf32>
    %292 = arith.mulf %291, %62 : vector<1x256xf32>
    %293 = arith.addf %289, %292 : vector<1x256xf32>
    %c26 = arith.constant 26 : index
    %294 = memref.load %arg4[%c26] : memref<98xf32, #tpu.memory_space<smem>>
    %295 = vector.broadcast %294 : f32 to vector<1x256xf32>
    %296 = arith.mulf %295, %65 : vector<1x256xf32>
    %297 = arith.addf %293, %296 : vector<1x256xf32>
    %c27 = arith.constant 27 : index
    %298 = memref.load %arg4[%c27] : memref<98xf32, #tpu.memory_space<smem>>
    %299 = vector.broadcast %298 : f32 to vector<1x256xf32>
    %300 = arith.mulf %299, %68 : vector<1x256xf32>
    %301 = arith.addf %297, %300 : vector<1x256xf32>
    %c70 = arith.constant 70 : index
    %302 = memref.load %arg4[%c70] : memref<98xf32, #tpu.memory_space<smem>>
    %303 = vector.broadcast %302 : f32 to vector<1x256xf32>
    %304 = arith.mulf %303, %71 : vector<1x256xf32>
    %305 = arith.addf %301, %304 : vector<1x256xf32>
    %c71 = arith.constant 71 : index
    %306 = memref.load %arg4[%c71] : memref<98xf32, #tpu.memory_space<smem>>
    %307 = vector.broadcast %306 : f32 to vector<1x256xf32>
    %308 = arith.mulf %307, %74 : vector<1x256xf32>
    %309 = arith.addf %305, %308 : vector<1x256xf32>
    %c72 = arith.constant 72 : index
    %310 = memref.load %arg4[%c72] : memref<98xf32, #tpu.memory_space<smem>>
    %311 = vector.broadcast %310 : f32 to vector<1x256xf32>
    %312 = arith.mulf %311, %77 : vector<1x256xf32>
    %313 = arith.addf %309, %312 : vector<1x256xf32>
    %c73 = arith.constant 73 : index
    %314 = memref.load %arg4[%c73] : memref<98xf32, #tpu.memory_space<smem>>
    %315 = vector.broadcast %314 : f32 to vector<1x256xf32>
    %316 = arith.mulf %315, %79 : vector<1x256xf32>
    %317 = arith.addf %313, %316 : vector<1x256xf32>
    %c74 = arith.constant 74 : index
    %318 = memref.load %arg4[%c74] : memref<98xf32, #tpu.memory_space<smem>>
    %319 = vector.broadcast %318 : f32 to vector<1x256xf32>
    %320 = arith.mulf %319, %82 : vector<1x256xf32>
    %321 = arith.addf %317, %320 : vector<1x256xf32>
    %c75 = arith.constant 75 : index
    %322 = memref.load %arg4[%c75] : memref<98xf32, #tpu.memory_space<smem>>
    %323 = vector.broadcast %322 : f32 to vector<1x256xf32>
    %324 = arith.mulf %323, %85 : vector<1x256xf32>
    %325 = arith.addf %321, %324 : vector<1x256xf32>
    %c76 = arith.constant 76 : index
    %326 = memref.load %arg4[%c76] : memref<98xf32, #tpu.memory_space<smem>>
    %327 = vector.broadcast %326 : f32 to vector<1x256xf32>
    %328 = arith.mulf %327, %88 : vector<1x256xf32>
    %329 = arith.addf %325, %328 : vector<1x256xf32>
    %330 = vector.extract_strided_slice %48 {offsets = [3, 0], sizes = [1, 256], strides = [1, 1]} : vector<7x256xf32> to vector<1x256xf32>
    %331 = arith.mulf %330, %329 : vector<1x256xf32>
    %332 = arith.addf %272, %331 : vector<1x256xf32>
    %cst_37 = arith.constant 0.000000e+00 : f32
    %333 = vector.broadcast %cst_37 : f32 to vector<1x256xf32>
    %c28 = arith.constant 28 : index
    %334 = memref.load %arg4[%c28] : memref<98xf32, #tpu.memory_space<smem>>
    %335 = vector.broadcast %334 : f32 to vector<1x256xf32>
    %336 = arith.mulf %335, %51 : vector<1x256xf32>
    %337 = arith.addf %333, %336 : vector<1x256xf32>
    %c29 = arith.constant 29 : index
    %338 = memref.load %arg4[%c29] : memref<98xf32, #tpu.memory_space<smem>>
    %339 = vector.broadcast %338 : f32 to vector<1x256xf32>
    %340 = arith.mulf %339, %54 : vector<1x256xf32>
    %341 = arith.addf %337, %340 : vector<1x256xf32>
    %c30 = arith.constant 30 : index
    %342 = memref.load %arg4[%c30] : memref<98xf32, #tpu.memory_space<smem>>
    %343 = vector.broadcast %342 : f32 to vector<1x256xf32>
    %344 = arith.mulf %343, %57 : vector<1x256xf32>
    %345 = arith.addf %341, %344 : vector<1x256xf32>
    %c31 = arith.constant 31 : index
    %346 = memref.load %arg4[%c31] : memref<98xf32, #tpu.memory_space<smem>>
    %347 = vector.broadcast %346 : f32 to vector<1x256xf32>
    %348 = arith.mulf %347, %59 : vector<1x256xf32>
    %349 = arith.addf %345, %348 : vector<1x256xf32>
    %c32 = arith.constant 32 : index
    %350 = memref.load %arg4[%c32] : memref<98xf32, #tpu.memory_space<smem>>
    %351 = vector.broadcast %350 : f32 to vector<1x256xf32>
    %352 = arith.mulf %351, %62 : vector<1x256xf32>
    %353 = arith.addf %349, %352 : vector<1x256xf32>
    %c33 = arith.constant 33 : index
    %354 = memref.load %arg4[%c33] : memref<98xf32, #tpu.memory_space<smem>>
    %355 = vector.broadcast %354 : f32 to vector<1x256xf32>
    %356 = arith.mulf %355, %65 : vector<1x256xf32>
    %357 = arith.addf %353, %356 : vector<1x256xf32>
    %c34 = arith.constant 34 : index
    %358 = memref.load %arg4[%c34] : memref<98xf32, #tpu.memory_space<smem>>
    %359 = vector.broadcast %358 : f32 to vector<1x256xf32>
    %360 = arith.mulf %359, %68 : vector<1x256xf32>
    %361 = arith.addf %357, %360 : vector<1x256xf32>
    %c77 = arith.constant 77 : index
    %362 = memref.load %arg4[%c77] : memref<98xf32, #tpu.memory_space<smem>>
    %363 = vector.broadcast %362 : f32 to vector<1x256xf32>
    %364 = arith.mulf %363, %71 : vector<1x256xf32>
    %365 = arith.addf %361, %364 : vector<1x256xf32>
    %c78 = arith.constant 78 : index
    %366 = memref.load %arg4[%c78] : memref<98xf32, #tpu.memory_space<smem>>
    %367 = vector.broadcast %366 : f32 to vector<1x256xf32>
    %368 = arith.mulf %367, %74 : vector<1x256xf32>
    %369 = arith.addf %365, %368 : vector<1x256xf32>
    %c79 = arith.constant 79 : index
    %370 = memref.load %arg4[%c79] : memref<98xf32, #tpu.memory_space<smem>>
    %371 = vector.broadcast %370 : f32 to vector<1x256xf32>
    %372 = arith.mulf %371, %77 : vector<1x256xf32>
    %373 = arith.addf %369, %372 : vector<1x256xf32>
    %c80 = arith.constant 80 : index
    %374 = memref.load %arg4[%c80] : memref<98xf32, #tpu.memory_space<smem>>
    %375 = vector.broadcast %374 : f32 to vector<1x256xf32>
    %376 = arith.mulf %375, %79 : vector<1x256xf32>
    %377 = arith.addf %373, %376 : vector<1x256xf32>
    %c81 = arith.constant 81 : index
    %378 = memref.load %arg4[%c81] : memref<98xf32, #tpu.memory_space<smem>>
    %379 = vector.broadcast %378 : f32 to vector<1x256xf32>
    %380 = arith.mulf %379, %82 : vector<1x256xf32>
    %381 = arith.addf %377, %380 : vector<1x256xf32>
    %c82 = arith.constant 82 : index
    %382 = memref.load %arg4[%c82] : memref<98xf32, #tpu.memory_space<smem>>
    %383 = vector.broadcast %382 : f32 to vector<1x256xf32>
    %384 = arith.mulf %383, %85 : vector<1x256xf32>
    %385 = arith.addf %381, %384 : vector<1x256xf32>
    %c83 = arith.constant 83 : index
    %386 = memref.load %arg4[%c83] : memref<98xf32, #tpu.memory_space<smem>>
    %387 = vector.broadcast %386 : f32 to vector<1x256xf32>
    %388 = arith.mulf %387, %88 : vector<1x256xf32>
    %389 = arith.addf %385, %388 : vector<1x256xf32>
    %c240_i32 = arith.constant 240 : i32
    %390 = tpu.dynamic_rotate %389 by %c240_i32 dim 1 : vector<1x256xf32>, i32 -> vector<1x256xf32>
    %391 = vector.extract_strided_slice %48 {offsets = [4, 0], sizes = [1, 256], strides = [1, 1]} : vector<7x256xf32> to vector<1x256xf32>
    %392 = arith.mulf %391, %390 : vector<1x256xf32>
    %393 = arith.addf %332, %392 : vector<1x256xf32>
    %cst_38 = arith.constant 0.000000e+00 : f32
    %394 = vector.broadcast %cst_38 : f32 to vector<1x256xf32>
    %c35 = arith.constant 35 : index
    %395 = memref.load %arg4[%c35] : memref<98xf32, #tpu.memory_space<smem>>
    %396 = vector.broadcast %395 : f32 to vector<1x256xf32>
    %397 = arith.mulf %396, %51 : vector<1x256xf32>
    %398 = arith.addf %394, %397 : vector<1x256xf32>
    %c36 = arith.constant 36 : index
    %399 = memref.load %arg4[%c36] : memref<98xf32, #tpu.memory_space<smem>>
    %400 = vector.broadcast %399 : f32 to vector<1x256xf32>
    %401 = arith.mulf %400, %54 : vector<1x256xf32>
    %402 = arith.addf %398, %401 : vector<1x256xf32>
    %c37 = arith.constant 37 : index
    %403 = memref.load %arg4[%c37] : memref<98xf32, #tpu.memory_space<smem>>
    %404 = vector.broadcast %403 : f32 to vector<1x256xf32>
    %405 = arith.mulf %404, %57 : vector<1x256xf32>
    %406 = arith.addf %402, %405 : vector<1x256xf32>
    %c38 = arith.constant 38 : index
    %407 = memref.load %arg4[%c38] : memref<98xf32, #tpu.memory_space<smem>>
    %408 = vector.broadcast %407 : f32 to vector<1x256xf32>
    %409 = arith.mulf %408, %59 : vector<1x256xf32>
    %410 = arith.addf %406, %409 : vector<1x256xf32>
    %c39 = arith.constant 39 : index
    %411 = memref.load %arg4[%c39] : memref<98xf32, #tpu.memory_space<smem>>
    %412 = vector.broadcast %411 : f32 to vector<1x256xf32>
    %413 = arith.mulf %412, %62 : vector<1x256xf32>
    %414 = arith.addf %410, %413 : vector<1x256xf32>
    %c40 = arith.constant 40 : index
    %415 = memref.load %arg4[%c40] : memref<98xf32, #tpu.memory_space<smem>>
    %416 = vector.broadcast %415 : f32 to vector<1x256xf32>
    %417 = arith.mulf %416, %65 : vector<1x256xf32>
    %418 = arith.addf %414, %417 : vector<1x256xf32>
    %c41 = arith.constant 41 : index
    %419 = memref.load %arg4[%c41] : memref<98xf32, #tpu.memory_space<smem>>
    %420 = vector.broadcast %419 : f32 to vector<1x256xf32>
    %421 = arith.mulf %420, %68 : vector<1x256xf32>
    %422 = arith.addf %418, %421 : vector<1x256xf32>
    %c84 = arith.constant 84 : index
    %423 = memref.load %arg4[%c84] : memref<98xf32, #tpu.memory_space<smem>>
    %424 = vector.broadcast %423 : f32 to vector<1x256xf32>
    %425 = arith.mulf %424, %71 : vector<1x256xf32>
    %426 = arith.addf %422, %425 : vector<1x256xf32>
    %c85 = arith.constant 85 : index
    %427 = memref.load %arg4[%c85] : memref<98xf32, #tpu.memory_space<smem>>
    %428 = vector.broadcast %427 : f32 to vector<1x256xf32>
    %429 = arith.mulf %428, %74 : vector<1x256xf32>
    %430 = arith.addf %426, %429 : vector<1x256xf32>
    %c86 = arith.constant 86 : index
    %431 = memref.load %arg4[%c86] : memref<98xf32, #tpu.memory_space<smem>>
    %432 = vector.broadcast %431 : f32 to vector<1x256xf32>
    %433 = arith.mulf %432, %77 : vector<1x256xf32>
    %434 = arith.addf %430, %433 : vector<1x256xf32>
    %c87 = arith.constant 87 : index
    %435 = memref.load %arg4[%c87] : memref<98xf32, #tpu.memory_space<smem>>
    %436 = vector.broadcast %435 : f32 to vector<1x256xf32>
    %437 = arith.mulf %436, %79 : vector<1x256xf32>
    %438 = arith.addf %434, %437 : vector<1x256xf32>
    %c88 = arith.constant 88 : index
    %439 = memref.load %arg4[%c88] : memref<98xf32, #tpu.memory_space<smem>>
    %440 = vector.broadcast %439 : f32 to vector<1x256xf32>
    %441 = arith.mulf %440, %82 : vector<1x256xf32>
    %442 = arith.addf %438, %441 : vector<1x256xf32>
    %c89 = arith.constant 89 : index
    %443 = memref.load %arg4[%c89] : memref<98xf32, #tpu.memory_space<smem>>
    %444 = vector.broadcast %443 : f32 to vector<1x256xf32>
    %445 = arith.mulf %444, %85 : vector<1x256xf32>
    %446 = arith.addf %442, %445 : vector<1x256xf32>
    %c90 = arith.constant 90 : index
    %447 = memref.load %arg4[%c90] : memref<98xf32, #tpu.memory_space<smem>>
    %448 = vector.broadcast %447 : f32 to vector<1x256xf32>
    %449 = arith.mulf %448, %88 : vector<1x256xf32>
    %450 = arith.addf %446, %449 : vector<1x256xf32>
    %c224_i32 = arith.constant 224 : i32
    %451 = tpu.dynamic_rotate %450 by %c224_i32 dim 1 : vector<1x256xf32>, i32 -> vector<1x256xf32>
    %452 = vector.extract_strided_slice %48 {offsets = [5, 0], sizes = [1, 256], strides = [1, 1]} : vector<7x256xf32> to vector<1x256xf32>
    %453 = arith.mulf %452, %451 : vector<1x256xf32>
    %454 = arith.addf %393, %453 : vector<1x256xf32>
    %cst_39 = arith.constant 0.000000e+00 : f32
    %455 = vector.broadcast %cst_39 : f32 to vector<1x256xf32>
    %c42 = arith.constant 42 : index
    %456 = memref.load %arg4[%c42] : memref<98xf32, #tpu.memory_space<smem>>
    %457 = vector.broadcast %456 : f32 to vector<1x256xf32>
    %458 = arith.mulf %457, %51 : vector<1x256xf32>
    %459 = arith.addf %455, %458 : vector<1x256xf32>
    %c43 = arith.constant 43 : index
    %460 = memref.load %arg4[%c43] : memref<98xf32, #tpu.memory_space<smem>>
    %461 = vector.broadcast %460 : f32 to vector<1x256xf32>
    %462 = arith.mulf %461, %54 : vector<1x256xf32>
    %463 = arith.addf %459, %462 : vector<1x256xf32>
    %c44 = arith.constant 44 : index
    %464 = memref.load %arg4[%c44] : memref<98xf32, #tpu.memory_space<smem>>
    %465 = vector.broadcast %464 : f32 to vector<1x256xf32>
    %466 = arith.mulf %465, %57 : vector<1x256xf32>
    %467 = arith.addf %463, %466 : vector<1x256xf32>
    %c45 = arith.constant 45 : index
    %468 = memref.load %arg4[%c45] : memref<98xf32, #tpu.memory_space<smem>>
    %469 = vector.broadcast %468 : f32 to vector<1x256xf32>
    %470 = arith.mulf %469, %59 : vector<1x256xf32>
    %471 = arith.addf %467, %470 : vector<1x256xf32>
    %c46 = arith.constant 46 : index
    %472 = memref.load %arg4[%c46] : memref<98xf32, #tpu.memory_space<smem>>
    %473 = vector.broadcast %472 : f32 to vector<1x256xf32>
    %474 = arith.mulf %473, %62 : vector<1x256xf32>
    %475 = arith.addf %471, %474 : vector<1x256xf32>
    %c47 = arith.constant 47 : index
    %476 = memref.load %arg4[%c47] : memref<98xf32, #tpu.memory_space<smem>>
    %477 = vector.broadcast %476 : f32 to vector<1x256xf32>
    %478 = arith.mulf %477, %65 : vector<1x256xf32>
    %479 = arith.addf %475, %478 : vector<1x256xf32>
    %c48 = arith.constant 48 : index
    %480 = memref.load %arg4[%c48] : memref<98xf32, #tpu.memory_space<smem>>
    %481 = vector.broadcast %480 : f32 to vector<1x256xf32>
    %482 = arith.mulf %481, %68 : vector<1x256xf32>
    %483 = arith.addf %479, %482 : vector<1x256xf32>
    %c91 = arith.constant 91 : index
    %484 = memref.load %arg4[%c91] : memref<98xf32, #tpu.memory_space<smem>>
    %485 = vector.broadcast %484 : f32 to vector<1x256xf32>
    %486 = arith.mulf %485, %71 : vector<1x256xf32>
    %487 = arith.addf %483, %486 : vector<1x256xf32>
    %c92 = arith.constant 92 : index
    %488 = memref.load %arg4[%c92] : memref<98xf32, #tpu.memory_space<smem>>
    %489 = vector.broadcast %488 : f32 to vector<1x256xf32>
    %490 = arith.mulf %489, %74 : vector<1x256xf32>
    %491 = arith.addf %487, %490 : vector<1x256xf32>
    %c93 = arith.constant 93 : index
    %492 = memref.load %arg4[%c93] : memref<98xf32, #tpu.memory_space<smem>>
    %493 = vector.broadcast %492 : f32 to vector<1x256xf32>
    %494 = arith.mulf %493, %77 : vector<1x256xf32>
    %495 = arith.addf %491, %494 : vector<1x256xf32>
    %c94 = arith.constant 94 : index
    %496 = memref.load %arg4[%c94] : memref<98xf32, #tpu.memory_space<smem>>
    %497 = vector.broadcast %496 : f32 to vector<1x256xf32>
    %498 = arith.mulf %497, %79 : vector<1x256xf32>
    %499 = arith.addf %495, %498 : vector<1x256xf32>
    %c95 = arith.constant 95 : index
    %500 = memref.load %arg4[%c95] : memref<98xf32, #tpu.memory_space<smem>>
    %501 = vector.broadcast %500 : f32 to vector<1x256xf32>
    %502 = arith.mulf %501, %82 : vector<1x256xf32>
    %503 = arith.addf %499, %502 : vector<1x256xf32>
    %c96 = arith.constant 96 : index
    %504 = memref.load %arg4[%c96] : memref<98xf32, #tpu.memory_space<smem>>
    %505 = vector.broadcast %504 : f32 to vector<1x256xf32>
    %506 = arith.mulf %505, %85 : vector<1x256xf32>
    %507 = arith.addf %503, %506 : vector<1x256xf32>
    %c97 = arith.constant 97 : index
    %508 = memref.load %arg4[%c97] : memref<98xf32, #tpu.memory_space<smem>>
    %509 = vector.broadcast %508 : f32 to vector<1x256xf32>
    %510 = arith.mulf %509, %88 : vector<1x256xf32>
    %511 = arith.addf %507, %510 : vector<1x256xf32>
    %c208_i32 = arith.constant 208 : i32
    %512 = tpu.dynamic_rotate %511 by %c208_i32 dim 1 : vector<1x256xf32>, i32 -> vector<1x256xf32>
    %513 = vector.extract_strided_slice %48 {offsets = [6, 0], sizes = [1, 256], strides = [1, 1]} : vector<7x256xf32> to vector<1x256xf32>
    %514 = arith.mulf %513, %512 : vector<1x256xf32>
    %515 = arith.addf %454, %514 : vector<1x256xf32>
    %516 = arith.negf %515 : vector<1x256xf32>
    %517 = math.exp %516 : vector<1x256xf32>
    %cst_40 = arith.constant 1.000000e+00 : f32
    %518 = vector.broadcast %cst_40 : f32 to vector<1x256xf32>
    %519 = arith.addf %518, %517 : vector<1x256xf32>
    %520 = arith.divf %518, %519 : vector<1x256xf32>
    %c0_41 = arith.constant 0 : index
    %c0_42 = arith.constant 0 : index
    %c0_43 = arith.constant 0 : index
    %521 = vector.load %arg7[%c0_41, %c0_42, %c0_43] : memref<1x32x256xf32, #tpu.memory_space<vmem>>, vector<1x32x256xf32>
    %522 = vector.shape_cast %521 : vector<1x32x256xf32> to vector<32x256xf32>
    %523 = vector.broadcast %520 : vector<1x256xf32> to vector<32x256xf32>
    %524 = arith.mulf %522, %523 : vector<32x256xf32>
    %c0_44 = arith.constant 0 : index
    %c0_45 = arith.constant 0 : index
    %c0_46 = arith.constant 0 : index
    %525 = vector.load %arg7[%c0_44, %c0_45, %c0_46] : memref<1x32x256xf32, #tpu.memory_space<vmem>>, vector<1x32x256xf32>
    %526 = vector.shape_cast %525 : vector<1x32x256xf32> to vector<32x256xf32>
    %527 = vector.shape_cast %524 : vector<32x256xf32> to vector<1x32x256xf32>
    tpu.vector_store %arg7[%c0_44, %c0_45, %c0_46], %527 {strides = array<i32>} : memref<1x32x256xf32, #tpu.memory_space<vmem>>, vector<1x32x256xf32>,
    return
  }
  func.func @transform_0(%arg0: i32) -> (i32, i32, i32) {
    %c0_i32 = arith.constant 0 : i32
    %c0_i32_0 = arith.constant 0 : i32
    %c0_i32_1 = arith.constant 0 : i32
    return %arg0, %c0_i32, %c0_i32_0 : i32, i32, i32
  }
  func.func @transform_1(%arg0: i32) -> (i32, i32) {
    %c0_i32 = arith.constant 0 : i32
    %c0_i32_0 = arith.constant 0 : i32
    %c0_i32_1 = arith.constant 0 : i32
    return %c0_i32, %c0_i32_0 : i32, i32
  }
  func.func @transform_2(%arg0: i32) -> (i32, i32) {
    %c0_i32 = arith.constant 0 : i32
    %c0_i32_0 = arith.constant 0 : i32
    %c0_i32_1 = arith.constant 0 : i32
    return %c0_i32, %c0_i32_0 : i32, i32
  }
  func.func @transform_3(%arg0: i32) -> i32 {
    %c0_i32 = arith.constant 0 : i32
    %c0_i32_0 = arith.constant 0 : i32
    return %c0_i32 : i32
  }
  func.func @transform_4(%arg0: i32) -> (i32, i32) {
    %c0_i32 = arith.constant 0 : i32
    %c0_i32_0 = arith.constant 0 : i32
    %c0_i32_1 = arith.constant 0 : i32
    return %c0_i32, %c0_i32_0 : i32, i32
  }
  func.func @transform_5(%arg0: i32) -> (i32, i32) {
    %c0_i32 = arith.constant 0 : i32
    %c0_i32_0 = arith.constant 0 : i32
    %c0_i32_1 = arith.constant 0 : i32
    return %c0_i32, %c0_i32_0 : i32, i32
  }
  func.func @transform_6(%arg0: i32) -> (i32, i32, i32) {
    %c0_i32 = arith.constant 0 : i32
    %c0_i32_0 = arith.constant 0 : i32
    %c0_i32_1 = arith.constant 0 : i32
    return %arg0, %c0_i32, %c0_i32_0 : i32, i32, i32
  }
}

</mosaic_0001>

<llo_original>
// kernel: tpu_custom_call.1
$region0: #{tpu_custom_call.1}
  #allocation0 [shape = 'u32[]', space=smem, size = 0x4, offset = 0x4, fixed_abs, tag = 'smem constant byte address 0x4 - core index']
  #allocation1 [shape = 'u32[72,128]{1,0:T(1,128)}', space=vmem, size = 0x9000, scoped, tag = 'internal scratch']
  %s0 = inlined_call_operand.hbm [shape: f32[2,32,256], index: 0, kind: input, shape index: {}]
  %s1 = inlined_call_operand.vmem [shape: f32[32,2], index: 1, kind: input, shape index: {}]
  %s2 = inlined_call_operand.vmem [shape: f32[32,2], index: 2, kind: input, shape index: {}]
  %s3 = inlined_call_operand.vmem [shape: f32[98], index: 3, kind: input, shape index: {}]
  %s4 = inlined_call_operand.vmem [shape: f32[7,256], index: 4, kind: input, shape index: {}]
  %s5 = inlined_call_operand.vmem [shape: f32[7,256], index: 5, kind: input, shape index: {}]
  %s6 = inlined_call_operand.hbm [shape: f32[2,32,256], index: 6, kind: output, shape index: {}]
  %s7 = sld [smem:[#allocation0]]
  $region65: #{tpu_custom_call.1} parent=0
    _
  %s9 = ssub.s32 1, %s7
  %s10 = scalar_select 0, %s9, %s7
  $region1: #{tpu_custom_call.1} parent=0
    #allocation2 [shape = 'u8[65536]{0}', space=vmem, size = 0x10000, scoped, tag = 'input window, operand 0']
    #allocation3 [shape = 's32[2]{0}', space=sflag, size = 0x8, scoped, tag = 'scoped memory for tpu_custom_call.1']
    #allocation4 [shape = 's32[2]{0}', space=sflag, size = 0x8, scoped, tag = 'scoped memory for tpu_custom_call.1']
    #allocation5 [shape = 's32[2]{0}', space=sflag, size = 0x8, scoped, tag = 'scoped memory for tpu_custom_call.1']
    #allocation6 [shape = 'u8[512]{0}', space=smem, size = 0x200, scoped, tag = 'input window, operand 3, single buffered']
    #allocation7 [shape = 'u8[65536]{0}', space=vmem, size = 0x10000, scoped, tag = 'output window, operand 0']
    %11 = vsyncpa [#allocation3], 0
    %s12 = scalar_lea.sflag [#allocation3], 1
    %13 = vsyncpa %s12, 0
    %14 = vsyncpa [#allocation5], 0
    %15 = vsyncpa [#allocation4], 0
    %s16 = scalar_lea.sflag [#allocation4], 1
    %17 = vsyncpa %s16, 0
    loop: start=0, step=1, limit=4
    $region2: #{tpu_custom_call.1} parent=1 // loop_pre_header
      _
    $region3: #{tpu_custom_call.1} parent=1 // loop_header
      %s19 = sphi 0, %s23
      %p20 = scmp.ge.s32.totalorder %s19, 4
      %s29 = sphi 0, %s31
      %s32 = sphi 0, %s29
      %s33 = sphi 0, %s32
      %s49 = sphi 0, %s33
      %s53 = sphi 0, %s53
      %s55 = sphi 0, %s53
      %s56 = sphi 0, %s55
      %s70 = sphi 0, %s56
      %s74 = sphi 0, %s74
      %s76 = sphi 0, %s74
      %s77 = sphi 0, %s76
      %s91 = sphi 0, %s77
      %s95 = sphi 0, %s95
      %s97 = sphi 0, %s95
      %s98 = sphi 0, %s97
      %s112 = sphi 0, %s98
      %s116 = sphi 0, %s116
      %s118 = sphi 0, %s116
      %s119 = sphi 0, %s118
      %s133 = sphi 0, %s119
      %s137 = sphi 0, %s137
      %s139 = sphi 0, %s137
      %s140 = sphi 0, %s139
      %s154 = sphi 0, %s140
      %s160 = sphi 0, %s162
      %s163 = sphi 0, %s160
      %s164 = sphi 0, %s163
      %s180 = sphi 0, %s164
    $region4: #{tpu_custom_call.1} parent=1 // loop_header_branch
      %22 = sbr.rel (%p20) target = $region8
    $region5: #{tpu_custom_call.1} parent=1 // loop_body
      %s24 = ssub.s32 %s19, 1
      %s25 = ssub.s32 %s19, 2
      %s26 = sadd.s32 %s19, 1
      %s27 = ssub.s32 %s19, %s26
      %p28 = scmp.eq.s32.totalorder %s27, 0
      %s30 = sadd.s32 %s29, 1
      %s31 = scalar_select %p28, %s29, %s30
      %p34 = pneg %p28
      %p35 = scmp.eq.s32.totalorder %s19, 1
      %p36 = por %p34, %p35
      %p37 = scmp.ne.s32.totalorder %s29, %s32
      %p38 = scmp.eq.s32.totalorder %s19, 0
      %p39 = por %p37, %p38
      %p40 = scmp.ne.s32.totalorder %s29, %s32
      %p41 = scmp.eq.s32.totalorder %s24, 1
      %p42 = por %p40, %p41
      %p43 = scmp.ne.s32.totalorder %s32, %s33
      %p44 = scmp.eq.s32.totalorder %s24, 0
      %p45 = por %p43, %p44
      %p46 = scmp.ne.s32.totalorder %s32, %s33
      %p47 = scmp.eq.s32.totalorder %s25, 1
      %p48 = por %p46, %p47
      %p50 = scmp.ne.s32.totalorder %s33, %s49
      %p51 = scmp.eq.s32.totalorder %s25, 0
      %p52 = por %p50, %p51
      %s54 = sadd.s32 %s53, 1
      %p57 = scmp.eq.s32.totalorder %s19, 1
      %p58 = scmp.ne.s32.totalorder %s53, %s55
      %p59 = scmp.eq.s32.totalorder %s19, 0
      %p60 = por %p58, %p59
      %p61 = scmp.ne.s32.totalorder %s53, %s55
      %p62 = scmp.eq.s32.totalorder %s24, 1
      %p63 = por %p61, %p62
      %p64 = scmp.ne.s32.totalorder %s55, %s56
      %p65 = scmp.eq.s32.totalorder %s24, 0
      %p66 = por %p64, %p65
      %p67 = scmp.ne.s32.totalorder %s55, %s56
      %p68 = scmp.eq.s32.totalorder %s25, 1
      %p69 = por %p67, %p68
      %p71 = scmp.ne.s32.totalorder %s56, %s70
      %p72 = scmp.eq.s32.totalorder %s25, 0
      %p73 = por %p71, %p72
      %s75 = sadd.s32 %s74, 1
      %p78 = scmp.eq.s32.totalorder %s19, 1
      %p79 = scmp.ne.s32.totalorder %s74, %s76
      %p80 = scmp.eq.s32.totalorder %s19, 0
      %p81 = por %p79, %p80
      %p82 = scmp.ne.s32.totalorder %s74, %s76
      %p83 = scmp.eq.s32.totalorder %s24, 1
      %p84 = por %p82, %p83
      %p85 = scmp.ne.s32.totalorder %s76, %s77
      %p86 = scmp.eq.s32.totalorder %s24, 0
      %p87 = por %p85, %p86
      %p88 = scmp.ne.s32.totalorder %s76, %s77
      %p89 = scmp.eq.s32.totalorder %s25, 1
      %p90 = por %p88, %p89
      %p92 = scmp.ne.s32.totalorder %s77, %s91
      %p93 = scmp.eq.s32.totalorder %s25, 0
      %p94 = por %p92, %p93
      %s96 = sadd.s32 %s95, 1
      %p99 = scmp.eq.s32.totalorder %s19, 1
      %p100 = scmp.ne.s32.totalorder %s95, %s97
      %p101 = scmp.eq.s32.totalorder %s19, 0
      %p102 = por %p100, %p101
      %p103 = scmp.ne.s32.totalorder %s95, %s97
      %p104 = scmp.eq.s32.totalorder %s24, 1
      %p105 = por %p103, %p104
      %p106 = scmp.ne.s32.totalorder %s97, %s98
      %p107 = scmp.eq.s32.totalorder %s24, 0
      %p108 = por %p106, %p107
      %p109 = scmp.ne.s32.totalorder %s97, %s98
      %p110 = scmp.eq.s32.totalorder %s25, 1
      %p111 = por %p109, %p110
      %p113 = scmp.ne.s32.totalorder %s98, %s112
      %p114 = scmp.eq.s32.totalorder %s25, 0
      %p115 = por %p113, %p114
      %s117 = sadd.s32 %s116, 1
      %p120 = scmp.eq.s32.totalorder %s19, 1
      %p121 = scmp.ne.s32.totalorder %s116, %s118
      %p122 = scmp.eq.s32.totalorder %s19, 0
      %p123 = por %p121, %p122
      %p124 = scmp.ne.s32.totalorder %s116, %s118
      %p125 = scmp.eq.s32.totalorder %s24, 1
      %p126 = por %p124, %p125
      %p127 = scmp.ne.s32.totalorder %s118, %s119
      %p128 = scmp.eq.s32.totalorder %s24, 0
      %p129 = por %p127, %p128
      %p130 = scmp.ne.s32.totalorder %s118, %s119
      %p131 = scmp.eq.s32.totalorder %s25, 1
      %p132 = por %p130, %p131
      %p134 = scmp.ne.s32.totalorder %s119, %s133
      %p135 = scmp.eq.s32.totalorder %s25, 0
      %p136 = por %p134, %p135
      %s138 = sadd.s32 %s137, 1
      %p141 = scmp.eq.s32.totalorder %s19, 1
      %p142 = scmp.ne.s32.totalorder %s137, %s139
      %p143 = scmp.eq.s32.totalorder %s19, 0
      %p144 = por %p142, %p143
      %p145 = scmp.ne.s32.totalorder %s137, %s139
      %p146 = scmp.eq.s32.totalorder %s24, 1
      %p147 = por %p145, %p146
      %p148 = scmp.ne.s32.totalorder %s139, %s140
      %p149 = scmp.eq.s32.totalorder %s24, 0
      %p150 = por %p148, %p149
      %p151 = scmp.ne.s32.totalorder %s139, %s140
      %p152 = scmp.eq.s32.totalorder %s25, 1
      %p153 = por %p151, %p152
      %p155 = scmp.ne.s32.totalorder %s140, %s154
      %p156 = scmp.eq.s32.totalorder %s25, 0
      %p157 = por %p155, %p156
      %s158 = ssub.s32 %s19, %s26
      %p159 = scmp.eq.s32.totalorder %s158, 0
      %s161 = sadd.s32 %s160, 1
      %s162 = scalar_select %p159, %s160, %s161
      %p165 = pneg %p159
      %p166 = scmp.eq.s32.totalorder %s19, 1
      %p167 = por %p165, %p166
      %p168 = scmp.ne.s32.totalorder %s160, %s163
      %p169 = scmp.eq.s32.totalorder %s19, 0
      %p170 = por %p168, %p169
      %p171 = scmp.ne.s32.totalorder %s160, %s163
      %p172 = scmp.eq.s32.totalorder %s24, 1
      %p173 = por %p171, %p172
      %p174 = scmp.ne.s32.totalorder %s163, %s164
      %p175 = scmp.eq.s32.totalorder %s24, 0
      %p176 = por %p174, %p175
      %p177 = scmp.ne.s32.totalorder %s163, %s164
      %p178 = scmp.eq.s32.totalorder %s25, 1
      %p179 = por %p177, %p178
      %p181 = scmp.ne.s32.totalorder %s164, %s180
      %p182 = scmp.eq.s32.totalorder %s25, 0
      %p183 = por %p181, %p182
      %p184 = scmp.le.s32.totalorder 1, %s19
      %p185 = scmp.lt.s32.totalorder %s19, 3
      %p186 = pnand %p184, %p185
      %p187 = pneg %p186
      // Predicated region
      $region9: #{tpu_custom_call.1} parent=5 // pred_check
        _
      $region10: #{tpu_custom_call.1} parent=5 // pred_check_branch
        %189 = sbr.rel (%p186) target = $region12
      $region11: #{tpu_custom_call.1} parent=5 // pred_region
        %s190 = ssub.s32 %s19, 1
        // Predicated region
        $region13: #{tpu_custom_call.1} parent=11 // pred_check
          %p191 = pneg %p66
        $region14: #{tpu_custom_call.1} parent=11 // pred_check_branch
          %193 = sbr.rel (%p191) target = $region16
        $region15: #{tpu_custom_call.1} parent=11 // pred_region
          _
        $region16: #{tpu_custom_call.1} parent=11 // pred_fallthru
          _
        // Predicated region
        $region17: #{tpu_custom_call.1} parent=11 // pred_check
          %p194 = pneg %p87
        $region18: #{tpu_custom_call.1} parent=11 // pred_check_branch
          %196 = sbr.rel (%p194) target = $region20
        $region19: #{tpu_custom_call.1} parent=11 // pred_region
          _
        $region20: #{tpu_custom_call.1} parent=11 // pred_fallthru
          _
        // Predicated region
        $region21: #{tpu_custom_call.1} parent=11 // pred_check
          %p197 = pneg %p108
        $region22: #{tpu_custom_call.1} parent=11 // pred_check_branch
          %199 = sbr.rel (%p197) target = $region24
        $region23: #{tpu_custom_call.1} parent=11 // pred_region
          %201 = vsyncadd [#allocation5], 0
          %s203 = sshll.u32 %s3, 4
          %s204 = int_to_ptr.vmem [resolvable:$true] %s203
          %206 = dma.vmem_to_smem %s204, 16, [#allocation6], [#allocation5]
        $region24: #{tpu_custom_call.1} parent=11 // pred_fallthru
          _
        // Predicated region
        $region25: #{tpu_custom_call.1} parent=11 // pred_check
          %p207 = pneg %p129
        $region26: #{tpu_custom_call.1} parent=11 // pred_check_branch
          %209 = sbr.rel (%p207) target = $region28
        $region27: #{tpu_custom_call.1} parent=11 // pred_region
          _
        $region28: #{tpu_custom_call.1} parent=11 // pred_fallthru
          _
        // Predicated region
        $region29: #{tpu_custom_call.1} parent=11 // pred_check
          %p210 = pneg %p150
        $region30: #{tpu_custom_call.1} parent=11 // pred_check_branch
          %212 = sbr.rel (%p210) target = $region32
        $region31: #{tpu_custom_call.1} parent=11 // pred_region
          _
        $region32: #{tpu_custom_call.1} parent=11 // pred_fallthru
          _
      $region12: #{tpu_custom_call.1} parent=5 // pred_fallthru
        _
      %p213 = scmp.lt.s32.totalorder %s19, 2
      // Predicated region
      $region33: #{tpu_custom_call.1} parent=5 // pred_check
        %p214 = pneg %p213
      $region34: #{tpu_custom_call.1} parent=5 // pred_check_branch
        %216 = sbr.rel (%p214) target = $region36
      $region35: #{tpu_custom_call.1} parent=5 // pred_region
        // Predicated region
        $region37: #{tpu_custom_call.1} parent=35 // pred_check
          %p217 = pneg %p39
        $region38: #{tpu_custom_call.1} parent=35 // pred_check_branch
          %219 = sbr.rel (%p217) target = $region40
        $region39: #{tpu_custom_call.1} parent=35 // pred_region
          %s220 = sand.u32 %s29, 1
          %s221 = scalar_lea.sflag [#allocation3], %s220
          %s222 = sand.u32 %s29, 1
          %s223 = smul.addr %s222, 64
          %s224 = scalar_lea.vmem [#allocation2], %s223
          %226 = vsyncadd %s221, 0
          %s227 = smul.addr %s19, 8
          %s228 = smul.addr %s227, 8
          %s229 = scalar_lea.hbm %s0, %s228
          %s230 = sshll.u32 %s229, 4
          %s231 = int_to_ptr.hbm [resolvable:$true] %s230
          %s232 = sshll.u32 %s224, 4
          %s233 = int_to_ptr.vmem [resolvable:$true] %s232
          %238 = dma.hbm_to_vmem [thread:$0]  %s231, 1024, %s233, %s221, 256, 256, 16
        $region40: #{tpu_custom_call.1} parent=35 // pred_fallthru
          _
      $region36: #{tpu_custom_call.1} parent=5 // pred_fallthru
        _
      %p239 = scmp.le.s32.totalorder 1, %s19
      %p240 = scmp.lt.s32.totalorder %s19, 3
      %p241 = pnand %p239, %p240
      %p242 = pneg %p241
      // Predicated region
      $region41: #{tpu_custom_call.1} parent=5 // pred_check
        _
      $region42: #{tpu_custom_call.1} parent=5 // pred_check_branch
        %244 = sbr.rel (%p241) target = $region44
      $region43: #{tpu_custom_call.1} parent=5 // pred_region
        %s245 = ssub.s32 %s19, 1
        %s246 = sand.u32 %s32, 1
        %s247 = scalar_lea.sflag [#allocation3], %s246
        %s248 = sand.u32 %s32, 1
        %s249 = smul.addr %s248, 64
        %s250 = scalar_lea.vmem [#allocation2], %s249
        // Predicated region
        $region45: #{tpu_custom_call.1} parent=43 // pred_check
          %p251 = pneg %p45
        $region46: #{tpu_custom_call.1} parent=43 // pred_check_branch
          %253 = sbr.rel (%p251) target = $region48
        $region47: #{tpu_custom_call.1} parent=43 // pred_region
          %255 = dma.done %s247, 1024
        $region48: #{tpu_custom_call.1} parent=43 // pred_fallthru
          _
        // Predicated region
        $region49: #{tpu_custom_call.1} parent=43 // pred_check
          %p256 = pneg %p108
        $region50: #{tpu_custom_call.1} parent=43 // pred_check_branch
          %258 = sbr.rel (%p256) target = $region52
        $region51: #{tpu_custom_call.1} parent=43 // pred_region
          %260 = dma.done [#allocation5], 16
        $region52: #{tpu_custom_call.1} parent=43 // pred_fallthru
          _
        %261 = sfence
        %s262 = sand.u32 %s32, 1
        %s263 = scalar_lea.sflag [#allocation3], %s262
        %s264 = sand.u32 %s32, 1
        %s265 = smul.addr %s264, 64
        %s266 = scalar_lea.vmem [#allocation2], %s265
        %p267 = pneg %p45
        %p268 = pneg %p42
        %p269 = pneg %p66
        %p270 = pneg %p63
        %p271 = pneg %p87
        %p272 = pneg %p84
        %p273 = pneg %p108
        %p274 = pneg %p105
        %p275 = pneg %p129
        %p276 = pneg %p126
        %p277 = pneg %p150
        %p278 = pneg %p147
        %p279 = pneg %p176
        %p280 = pneg %p173
        %s281 = sand.u32 %s163, 1
        %s282 = scalar_lea.sflag [#allocation4], %s281
        %s283 = sand.u32 %s163, 1
        %s284 = smul.addr %s283, 64
        %s285 = scalar_lea.vmem [#allocation7], %s284
        %v286 = vld [vmem:[%s250] sm:$0xff]
        %v287 = vld [vmem:[%s250 + $0x8] sm:$0xff]
        %v288 = vld [vmem:[%s250 + $0x10] sm:$0xff]
        %v289 = vld [vmem:[%s250 + $0x18] sm:$0xff]
        %v290 = vld [vmem:[%s250 + $0x20] sm:$0xff]
        %v291 = vld [vmem:[%s250 + $0x28] sm:$0xff]
        %v292 = vld [vmem:[%s250 + $0x30] sm:$0xff]
        %v293 = vld [vmem:[%s250 + $0x38] sm:$0xff]
        %v294 = vadd.f32 %v286, %v287
        %295 = vadd.xlane.f32.xlu0 %v294
        %v296 = vpop.xlane.xlu0 %295
        %v297 = vadd.f32 %v288, %v289
        %298 = vadd.xlane.f32.xlu0 %v297
        %v299 = vpop.xlane.xlu0 %298
        %v300 = vadd.f32 %v290, %v291
        %301 = vadd.xlane.f32.xlu0 %v300
        %v302 = vpop.xlane.xlu0 %301
        %v303 = vadd.f32 %v292, %v293
        %304 = vadd.xlane.f32.xlu0 %v303
        %v305 = vpop.xlane.xlu0 %304
        %v306 = vrcp.pop 256.0
        %v307 = vmul.f32 256.0, %v306
        %v308 = vsub.f32 1.0, %v307
        %v309 = vmul.f32 %v306, %v308
        %v310 = vadd.f32 %v306, %v309
        %vm311 = vweird.f32 %v306
        %v312 = vsel %vm311, %v306, %v310
        %v313 = vmul.f32 %v296, %v312
        %v314 = vmul.f32 %v299, %v312
        %v315 = vmul.f32 %v302, %v312
        %v316 = vmul.f32 %v305, %v312
        %v317 = vmax.f32 %v286, %v287
        %318 = vmax.xlane.f32.xlu0 %v317
        %v319 = vpop.xlane.xlu0 %318
        %v320 = vmax.f32 %v288, %v289
        %321 = vmax.xlane.f32.xlu0 %v320
        %v322 = vpop.xlane.xlu0 %321
        %v323 = vmax.f32 %v290, %v291
        %324 = vmax.xlane.f32.xlu0 %v323
        %v325 = vpop.xlane.xlu0 %324
        %v326 = vmax.f32 %v292, %v293
        %327 = vmax.xlane.f32.xlu0 %v326
        %v328 = vpop.xlane.xlu0 %327
        %v329 = vld [vmem:[%s1] sm:$0xff]
        %v330 = vld [vmem:[%s1 + $0x8] sm:$0xff]
        %v331 = vld [vmem:[%s1 + $0x10] sm:$0xff]
        %v332 = vld [vmem:[%s1 + $0x18] sm:$0xff]
        %v333 = vld [vmem:[%s2] sm:$0xff]
        %v334 = vld [vmem:[%s2 + $0x8] sm:$0xff]
        %v335 = vld [vmem:[%s2 + $0x10] sm:$0xff]
        %v336 = vld [vmem:[%s2 + $0x18] sm:$0xff]
        %v337 = vmul.f32 %v329, %v313
        %v338 = vmul.f32 %v330, %v314
        %v339 = vmul.f32 %v331, %v315
        %v340 = vmul.f32 %v332, %v316
        %vm341 = vcmask 15360
        %v342 = vsel %vm341, %v337, 0.0
        %v343 = vsel %vm341, %v338, 0.0
        %v344 = vadd.f32 %v342, %v343
        %v345 = vsel %vm341, %v339, 0.0
        %v346 = vadd.f32 %v344, %v345
        %v347 = vsel %vm341, %v340, 0.0
        %v348 = vadd.f32 %v346, %v347
        %v349 = vrot.slane %v348, 4
        %v350 = vadd.f32 %v348, %v349
        %v351 = vrot.slane %v350, 2
        %v352 = vadd.f32 %v350, %v351
        %v353 = vrot.slane %v352, 1
        %v354 = vadd.f32 %v352, %v353
        %v355 = vmax.f32 %v354, 0.0
        %v356 = vmul.f32 %v333, %v355
        %v357 = vmul.f32 %v334, %v355
        %v358 = vmul.f32 %v335, %v355
        %v359 = vmul.f32 %v336, %v355
        %v360 = vsel %vm341, %v356, 0.0
        %361 = vadd.xlane.f32.xlu0 %v360
        %v362 = vpop.xlane.xlu0 %361
        %v363 = vsel %vm341, %v357, 0.0
        %364 = vadd.xlane.f32.xlu0 %v363
        %v365 = vpop.xlane.xlu0 %364
        %v366 = vsel %vm341, %v358, 0.0
        %367 = vadd.xlane.f32.xlu0 %v366
        %v368 = vpop.xlane.xlu0 %367
        %v369 = vsel %vm341, %v359, 0.0
        %370 = vadd.xlane.f32.xlu0 %v369
        %v371 = vpop.xlane.xlu0 %370
        %v372 = vmul.f32 %v329, %v319
        %v373 = vmul.f32 %v330, %v322
        %v374 = vmul.f32 %v331, %v325
        %v375 = vmul.f32 %v332, %v328
        %v376 = vsel %vm341, %v372, 0.0
        %v377 = vsel %vm341, %v373, 0.0
        %v378 = vadd.f32 %v376, %v377
        %v379 = vsel %vm341, %v374, 0.0
        %v380 = vadd.f32 %v378, %v379
        %v381 = vsel %vm341, %v375, 0.0
        %v382 = vadd.f32 %v380, %v381
        %v383 = vrot.slane %v382, 4
        %v384 = vadd.f32 %v382, %v383
        %v385 = vrot.slane %v384, 2
        %v386 = vadd.f32 %v384, %v385
        %v387 = vrot.slane %v386, 1
        %v388 = vadd.f32 %v386, %v387
        %v389 = vmax.f32 %v388, 0.0
        %v390 = vmul.f32 %v333, %v389
        %v391 = vmul.f32 %v334, %v389
        %v392 = vmul.f32 %v335, %v389
        %v393 = vmul.f32 %v336, %v389
        %v394 = vsel %vm341, %v390, 0.0
        %395 = vadd.xlane.f32.xlu0 %v394
        %v396 = vpop.xlane.xlu0 %395
        %v397 = vsel %vm341, %v391, 0.0
        %398 = vadd.xlane.f32.xlu0 %v397
        %v399 = vpop.xlane.xlu0 %398
        %v400 = vsel %vm341, %v392, 0.0
        %401 = vadd.xlane.f32.xlu0 %v400
        %v402 = vpop.xlane.xlu0 %401
        %v403 = vsel %vm341, %v393, 0.0
        %404 = vadd.xlane.f32.xlu0 %v403
        %v405 = vpop.xlane.xlu0 %404
        %v406 = vadd.f32 %v362, %v396
        %v407 = vadd.f32 %v365, %v399
        %v408 = vadd.f32 %v368, %v402
        %v409 = vadd.f32 %v371, %v405
        %v410 = vxor.u32 %v406, 2147483648
        %v411 = vxor.u32 %v407, 2147483648
        %v412 = vxor.u32 %v408, 2147483648
        %v413 = vxor.u32 %v409, 2147483648
        %v414 = vmul.f32 %v410, 1.442695
        %v415 = vpow.pop %v414
        %v416 = vmul.f32 %v411, 1.442695
        %v417 = vpow.pop %v416
        %v418 = vmul.f32 %v412, 1.442695
        %v419 = vpow.pop %v418
        %v420 = vmul.f32 %v413, 1.442695
        %v421 = vpow.pop %v420
        %v422 = vadd.f32 %v415, 1.0
        %v423 = vadd.f32 %v417, 1.0
        %v424 = vadd.f32 %v419, 1.0
        %v425 = vadd.f32 %v421, 1.0
        %v426 = vrcp.pop %v422
        %v427 = vmul.f32 %v422, %v426
        %v428 = vsub.f32 1.0, %v427
        %v429 = vmul.f32 %v426, %v428
        %v430 = vadd.f32 %v426, %v429
        %vm431 = vweird.f32 %v422
        %vm432 = vweird.f32 %v426
        %vm433 = vmor %vm431, %vm432
        %v434 = vsel %vm433, %v426, %v430
        %v435 = vand.u32 2147483647, %v422
        %vm436 = vcmp.eq.f32.partialorder %v435, 8.507059e+37
        %v437 = vand.u32 %v422, 2147483648
        %v438 = vor.u32 1.1754944e-38, %v437
        %v439 = vsel %vm436, %v438, %v434
        %v440 = vmul.f32 1.0, %v439
        %v441 = vrcp.pop %v423
        %v442 = vmul.f32 %v423, %v441
        %v443 = vsub.f32 1.0, %v442
        %v444 = vmul.f32 %v441, %v443
        %v445 = vadd.f32 %v441, %v444
        %vm446 = vweird.f32 %v423
        %vm447 = vweird.f32 %v441
        %vm448 = vmor %vm446, %vm447
        %v449 = vsel %vm448, %v441, %v445
        %v450 = vand.u32 2147483647, %v423
        %vm451 = vcmp.eq.f32.partialorder %v450, 8.507059e+37
        %v452 = vand.u32 %v423, 2147483648
        %v453 = vor.u32 1.1754944e-38, %v452
        %v454 = vsel %vm451, %v453, %v449
        %v455 = vmul.f32 1.0, %v454
        %v456 = vrcp.pop %v424
        %v457 = vmul.f32 %v424, %v456
        %v458 = vsub.f32 1.0, %v457
        %v459 = vmul.f32 %v456, %v458
        %v460 = vadd.f32 %v456, %v459
        %vm461 = vweird.f32 %v424
        %vm462 = vweird.f32 %v456
        %vm463 = vmor %vm461, %vm462
        %v464 = vsel %vm463, %v456, %v460
        %v465 = vand.u32 2147483647, %v424
        %vm466 = vcmp.eq.f32.partialorder %v465, 8.507059e+37
        %v467 = vand.u32 %v424, 2147483648
        %v468 = vor.u32 1.1754944e-38, %v467
        %v469 = vsel %vm466, %v468, %v464
        %v470 = vmul.f32 1.0, %v469
        %v471 = vrcp.pop %v425
        %v472 = vmul.f32 %v425, %v471
        %v473 = vsub.f32 1.0, %v472
        %v474 = vmul.f32 %v471, %v473
        %v475 = vadd.f32 %v471, %v474
        %vm476 = vweird.f32 %v425
        %vm477 = vweird.f32 %v471
        %vm478 = vmor %vm476, %vm477
        %v479 = vsel %vm478, %v471, %v475
        %v480 = vand.u32 2147483647, %v425
        %vm481 = vcmp.eq.f32.partialorder %v480, 8.507059e+37
        %v482 = vand.u32 %v425, 2147483648
        %v483 = vor.u32 1.1754944e-38, %v482
        %v484 = vsel %vm481, %v483, %v479
        %v485 = vmul.f32 1.0, %v484
        %v486 = vmul.f32 %v286, %v440
        %v487 = vmul.f32 %v287, %v440
        %v488 = vmul.f32 %v288, %v455
        %v489 = vmul.f32 %v289, %v455
        %v490 = vmul.f32 %v290, %v470
        %v491 = vmul.f32 %v291, %v470
        %v492 = vmul.f32 %v292, %v485
        %v493 = vmul.f32 %v293, %v485
        %v494 = vadd.f32 %v486, %v488
        %v495 = vadd.f32 %v494, %v490
        %v496 = vadd.f32 %v495, %v492
        %v497 = vrot.slane %v496, 4
        %v498 = vadd.f32 %v496, %v497
        %v499 = vrot.slane %v498, 2
        %v500 = vadd.f32 %v498, %v499
        %v501 = vrot.slane %v500, 1
        %v502 = vadd.f32 %v500, %v501
        %v503 = vadd.f32 %v487, %v489
        %v504 = vadd.f32 %v503, %v491
        %v505 = vadd.f32 %v504, %v493
        %v506 = vrot.slane %v505, 4
        %v507 = vadd.f32 %v505, %v506
        %v508 = vrot.slane %v507, 2
        %v509 = vadd.f32 %v507, %v508
        %v510 = vrot.slane %v509, 1
        %v511 = vadd.f32 %v509, %v510
        %v512 = vrcp.pop 32.0
        %v513 = vmul.f32 32.0, %v512
        %v514 = vsub.f32 1.0, %v513
        %v515 = vmul.f32 %v512, %v514
        %v516 = vadd.f32 %v512, %v515
        %vm517 = vweird.f32 %v512
        %v518 = vsel %vm517, %v512, %v516
        %v519 = vmul.f32 %v502, %v518
        %v520 = vmul.f32 %v511, %v518
        %v521 = vmax.f32 %v486, %v490
        %v522 = vmax.f32 %v488, %v492
        %v523 = vmax.f32 %v521, %v522
        %v524 = vrot.slane %v523, 4
        %v525 = vmax.f32 %v523, %v524
        %v526 = vrot.slane %v525, 2
        %v527 = vmax.f32 %v525, %v526
        %v528 = vrot.slane %v527, 1
        %v529 = vmax.f32 %v527, %v528
        %v530 = vmax.f32 %v487, %v491
        %v531 = vmax.f32 %v489, %v493
        %v532 = vmax.f32 %v530, %v531
        %v533 = vrot.slane %v532, 4
        %v534 = vmax.f32 %v532, %v533
        %v535 = vrot.slane %v534, 2
        %v536 = vmax.f32 %v534, %v535
        %v537 = vrot.slane %v536, 1
        %v538 = vmax.f32 %v536, %v537
        %539 = vst [vmem:[%s285] sm:$0xff] %v486
        %540 = vst [vmem:[%s285 + $0x8] sm:$0xff] %v487
        %541 = vst [vmem:[%s285 + $0x10] sm:$0xff] %v488
        %542 = vst [vmem:[%s285 + $0x18] sm:$0xff] %v489
        %543 = vst [vmem:[%s285 + $0x20] sm:$0xff] %v490
        %544 = vst [vmem:[%s285 + $0x28] sm:$0xff] %v491
        %545 = vst [vmem:[%s285 + $0x30] sm:$0xff] %v492
        %546 = vst [vmem:[%s285 + $0x38] sm:$0xff] %v493
        %v547 = vld [vmem:[%s4] sm:$0x7f]
        %v548 = vld [vmem:[%s4 + $0x8] sm:$0x7f]
        %v549 = vld [vmem:[%s5] sm:$0x7f]
        %v550 = vld [vmem:[%s5 + $0x8] sm:$0x7f]
        %551 = vrot.lane.b32.xlu0 %v519, 3
        %v552 = vpop.permute.xlu0 %551
        %553 = vrot.lane.b32.xlu0 %v520, 3
        %v554 = vpop.permute.xlu0 %553
        %v555 = vlaneseq
        %v556 = vand.u32 %v555, 127
        %vm557 = vcmp.lt.s32.totalorder %v556, 3
        %v558 = vsel %vm557, %v552, %v554
        %v559 = vsel %vm557, %v554, %v552
        %v560 = vmul.f32 %v547, %v559
        %v561 = vmul.f32 %v548, %v558
        %562 = vrot.lane.b32.xlu0 %v519, 2
        %v563 = vpop.permute.xlu0 %562
        %564 = vrot.lane.b32.xlu0 %v520, 2
        %v565 = vpop.permute.xlu0 %564
        %vm566 = vcmp.lt.s32.totalorder %v556, 2
        %v567 = vsel %vm566, %v563, %v565
        %v568 = vsel %vm566, %v565, %v563
        %v571 = vrot.slane %v568, 7
        %v572 = vrot.slane %v567, 7
        %v575 = vmul.f32 %v547, %v571
        %v576 = vmul.f32 %v548, %v572
        %577 = vrot.lane.b32.xlu0 %v519, 1
        %v578 = vpop.permute.xlu0 %577
        %579 = vrot.lane.b32.xlu0 %v520, 1
        %v580 = vpop.permute.xlu0 %579
        %vm581 = vcmp.lt.s32.totalorder %v556, 1
        %v582 = vsel %vm581, %v578, %v580
        %v583 = vsel %vm581, %v580, %v578
        %v586 = vrot.slane %v583, 6
        %v587 = vrot.slane %v582, 6
        %v590 = vmul.f32 %v547, %v586
        %v591 = vmul.f32 %v548, %v587
        %v592 = vmul.f32 %v547, %v519
        %v593 = vmul.f32 %v548, %v520
        %594 = vrot.lane.b32.xlu0 %v519, 127
        %v595 = vpop.permute.xlu0 %594
        %596 = vrot.lane.b32.xlu0 %v520, 127
        %v597 = vpop.permute.xlu0 %596
        %vm598 = vcmp.lt.s32.totalorder %v556, 127
        %v599 = vsel %vm598, %v595, %v597
        %v600 = vsel %vm598, %v597, %v595
        %v603 = vrot.slane %v599, 4
        %v604 = vrot.slane %v600, 4
        %v607 = vmul.f32 %v547, %v603
        %v608 = vmul.f32 %v548, %v604
        %609 = vrot.lane.b32.xlu0 %v519, 126
        %v610 = vpop.permute.xlu0 %609
        %611 = vrot.lane.b32.xlu0 %v520, 126
        %v612 = vpop.permute.xlu0 %611
        %vm613 = vcmp.lt.s32.totalorder %v556, 126
        %v614 = vsel %vm613, %v610, %v612
        %v615 = vsel %vm613, %v612, %v610
        %v618 = vrot.slane %v614, 3
        %v619 = vrot.slane %v615, 3
        %v622 = vmul.f32 %v547, %v618
        %v623 = vmul.f32 %v548, %v619
        %624 = vrot.lane.b32.xlu0 %v519, 125
        %v625 = vpop.permute.xlu0 %624
        %626 = vrot.lane.b32.xlu0 %v520, 125
        %v627 = vpop.permute.xlu0 %626
        %vm628 = vcmp.lt.s32.totalorder %v556, 125
        %v629 = vsel %vm628, %v625, %v627
        %v630 = vsel %vm628, %v627, %v625
        %v633 = vrot.slane %v629, 2
        %v634 = vrot.slane %v630, 2
        %v637 = vmul.f32 %v547, %v633
        %v638 = vmul.f32 %v548, %v634
        %639 = vrot.lane.b32.xlu0 %v529, 3
        %v640 = vpop.permute.xlu0 %639
        %641 = vrot.lane.b32.xlu0 %v538, 3
        %v642 = vpop.permute.xlu0 %641
        %v643 = vsel %vm557, %v640, %v642
        %v644 = vsel %vm557, %v642, %v640
        %v645 = vmul.f32 %v547, %v644
        %v646 = vmul.f32 %v548, %v643
        %647 = vrot.lane.b32.xlu0 %v529, 2
        %v648 = vpop.permute.xlu0 %647
        %649 = vrot.lane.b32.xlu0 %v538, 2
        %v650 = vpop.permute.xlu0 %649
        %v651 = vsel %vm566, %v648, %v650
        %v652 = vsel %vm566, %v650, %v648
        %v655 = vrot.slane %v652, 7
        %v656 = vrot.slane %v651, 7
        %v659 = vmul.f32 %v547, %v655
        %v660 = vmul.f32 %v548, %v656
        %661 = vrot.lane.b32.xlu0 %v529, 1
        %v662 = vpop.permute.xlu0 %661
        %663 = vrot.lane.b32.xlu0 %v538, 1
        %v664 = vpop.permute.xlu0 %663
        %v665 = vsel %vm581, %v662, %v664
        %v666 = vsel %vm581, %v664, %v662
        %v669 = vrot.slane %v666, 6
        %v670 = vrot.slane %v665, 6
        %v673 = vmul.f32 %v547, %v669
        %v674 = vmul.f32 %v548, %v670
        %v675 = vmul.f32 %v547, %v529
        %v676 = vmul.f32 %v548, %v538
        %677 = vrot.lane.b32.xlu0 %v529, 127
        %v678 = vpop.permute.xlu0 %677
        %679 = vrot.lane.b32.xlu0 %v538, 127
        %v680 = vpop.permute.xlu0 %679
        %v681 = vsel %vm598, %v678, %v680
        %v682 = vsel %vm598, %v680, %v678
        %v685 = vrot.slane %v681, 4
        %v686 = vrot.slane %v682, 4
        %v689 = vmul.f32 %v547, %v685
        %v690 = vmul.f32 %v548, %v686
        %691 = vrot.lane.b32.xlu0 %v529, 126
        %v692 = vpop.permute.xlu0 %691
        %693 = vrot.lane.b32.xlu0 %v538, 126
        %v694 = vpop.permute.xlu0 %693
        %v695 = vsel %vm613, %v692, %v694
        %v696 = vsel %vm613, %v694, %v692
        %v699 = vrot.slane %v695, 3
        %v700 = vrot.slane %v696, 3
        %v703 = vmul.f32 %v547, %v699
        %v704 = vmul.f32 %v548, %v700
        %705 = vrot.lane.b32.xlu0 %v529, 125
        %v706 = vpop.permute.xlu0 %705
        %707 = vrot.lane.b32.xlu0 %v538, 125
        %v708 = vpop.permute.xlu0 %707
        %v709 = vsel %vm628, %v706, %v708
        %v710 = vsel %vm628, %v708, %v706
        %v713 = vrot.slane %v709, 2
        %v714 = vrot.slane %v710, 2
        %v717 = vmul.f32 %v547, %v713
        %v718 = vmul.f32 %v548, %v714
        %s719 = sld [smem:[#allocation6]]
        %v720 = vstv %s719
        %v721 = vmul.f32 %v720, %v560
        %v722 = vmul.f32 %v720, %v561
        %v723 = vadd.f32 %v721, 0.0
        %v724 = vadd.f32 %v722, 0.0
        %s725 = sld [smem:[#allocation6 + $0x1]]
        %v726 = vstv %s725
        %v727 = vmul.f32 %v726, %v575
        %v728 = vmul.f32 %v726, %v576
        %v731 = vrot.slane %v727, 1
        %v732 = vrot.slane %v728, 1
        %v735 = vadd.f32 %v723, %v731
        %v736 = vadd.f32 %v724, %v732
        %s737 = sld [smem:[#allocation6 + $0x2]]
        %v738 = vstv %s737
        %v739 = vmul.f32 %v738, %v590
        %v740 = vmul.f32 %v738, %v591
        %v743 = vrot.slane %v739, 2
        %v744 = vrot.slane %v740, 2
        %v747 = vadd.f32 %v735, %v743
        %v748 = vadd.f32 %v736, %v744
        %s749 = sld [smem:[#allocation6 + $0x3]]
        %v750 = vstv %s749
        %v751 = vmul.f32 %v750, %v592
        %v752 = vmul.f32 %v750, %v593
        %v755 = vrot.slane %v751, 3
        %v756 = vrot.slane %v752, 3
        %v759 = vadd.f32 %v747, %v755
        %v760 = vadd.f32 %v748, %v756
        %s761 = sld [smem:[#allocation6 + $0x4]]
        %v762 = vstv %s761
        %v763 = vmul.f32 %v762, %v607
        %v764 = vmul.f32 %v762, %v608
        %v767 = vrot.slane %v763, 4
        %v768 = vrot.slane %v764, 4
        %v771 = vadd.f32 %v759, %v767
        %v772 = vadd.f32 %v760, %v768
        %s773 = sld [smem:[#allocation6 + $0x5]]
        %v774 = vstv %s773
        %v775 = vmul.f32 %v774, %v622
        %v776 = vmul.f32 %v774, %v623
        %v779 = vrot.slane %v775, 5
        %v780 = vrot.slane %v776, 5
        %v783 = vadd.f32 %v771, %v779
        %v784 = vadd.f32 %v772, %v780
        %s785 = sld [smem:[#allocation6 + $0x6]]
        %v786 = vstv %s785
        %v787 = vmul.f32 %v786, %v637
        %v788 = vmul.f32 %v786, %v638
        %v791 = vrot.slane %v787, 6
        %v792 = vrot.slane %v788, 6
        %v795 = vadd.f32 %v783, %v791
        %v796 = vadd.f32 %v784, %v792
        %s797 = sld [smem:[#allocation6 + $0x31]]
        %v798 = vstv %s797
        %v799 = vmul.f32 %v798, %v645
        %v800 = vmul.f32 %v798, %v646
        %v801 = vadd.f32 %v795, %v799
        %v802 = vadd.f32 %v796, %v800
        %s803 = sld [smem:[#allocation6 + $0x32]]
        %v804 = vstv %s803
        %v805 = vmul.f32 %v804, %v659
        %v806 = vmul.f32 %v804, %v660
        %v809 = vrot.slane %v805, 1
        %v810 = vrot.slane %v806, 1
        %v813 = vadd.f32 %v801, %v809
        %v814 = vadd.f32 %v802, %v810
        %s815 = sld [smem:[#allocation6 + $0x33]]
        %v816 = vstv %s815
        %v817 = vmul.f32 %v816, %v673
        %v818 = vmul.f32 %v816, %v674
        %v821 = vrot.slane %v817, 2
        %v822 = vrot.slane %v818, 2
        %v825 = vadd.f32 %v813, %v821
        %v826 = vadd.f32 %v814, %v822
        %s827 = sld [smem:[#allocation6 + $0x34]]
        %v828 = vstv %s827
        %v829 = vmul.f32 %v828, %v675
        %v830 = vmul.f32 %v828, %v676
        %v833 = vrot.slane %v829, 3
        %v834 = vrot.slane %v830, 3
        %v837 = vadd.f32 %v825, %v833
        %v838 = vadd.f32 %v826, %v834
        %s839 = sld [smem:[#allocation6 + $0x35]]
        %v840 = vstv %s839
        %v841 = vmul.f32 %v840, %v689
        %v842 = vmul.f32 %v840, %v690
        %v845 = vrot.slane %v841, 4
        %v846 = vrot.slane %v842, 4
        %v849 = vadd.f32 %v837, %v845
        %v850 = vadd.f32 %v838, %v846
        %s851 = sld [smem:[#allocation6 + $0x36]]
        %v852 = vstv %s851
        %v853 = vmul.f32 %v852, %v703
        %v854 = vmul.f32 %v852, %v704
        %v857 = vrot.slane %v853, 5
        %v858 = vrot.slane %v854, 5
        %v861 = vadd.f32 %v849, %v857
        %v862 = vadd.f32 %v850, %v858
        %s863 = sld [smem:[#allocation6 + $0x37]]
        %v864 = vstv %s863
        %v865 = vmul.f32 %v864, %v717
        %v866 = vmul.f32 %v864, %v718
        %v869 = vrot.slane %v865, 6
        %v870 = vrot.slane %v866, 6
        %v873 = vadd.f32 %v861, %v869
        %v874 = vadd.f32 %v862, %v870
        %875 = vrot.lane.b32.xlu0 %v873, 48
        %v876 = vpop.permute.xlu0 %875
        %877 = vrot.lane.b32.xlu0 %v874, 48
        %v878 = vpop.permute.xlu0 %877
        %vm879 = vcmp.lt.s32.totalorder %v556, 48
        %v880 = vsel %vm879, %v876, %v878
        %v881 = vsel %vm879, %v878, %v876
        %v882 = vmul.f32 %v549, %v881
        %v883 = vmul.f32 %v550, %v880
        %v884 = vadd.f32 %v882, 0.0
        %v885 = vadd.f32 %v883, 0.0
        %s886 = sld [smem:[#allocation6 + $0x7]]
        %v887 = vstv %s886
        %v888 = vmul.f32 %v887, %v560
        %v889 = vmul.f32 %v887, %v561
        %v890 = vadd.f32 %v888, 0.0
        %v891 = vadd.f32 %v889, 0.0
        %s892 = sld [smem:[#allocation6 + $0x8]]
        %v893 = vstv %s892
        %v894 = vmul.f32 %v893, %v575
        %v895 = vmul.f32 %v893, %v576
        %v898 = vrot.slane %v894, 1
        %v899 = vrot.slane %v895, 1
        %v902 = vadd.f32 %v890, %v898
        %v903 = vadd.f32 %v891, %v899
        %s904 = sld [smem:[#allocation6 + $0x9]]
        %v905 = vstv %s904
        %v906 = vmul.f32 %v905, %v590
        %v907 = vmul.f32 %v905, %v591
        %v910 = vrot.slane %v906, 2
        %v911 = vrot.slane %v907, 2
        %v914 = vadd.f32 %v902, %v910
        %v915 = vadd.f32 %v903, %v911
        %s916 = sld [smem:[#allocation6 + $0xa]]
        %v917 = vstv %s916
        %v918 = vmul.f32 %v917, %v592
        %v919 = vmul.f32 %v917, %v593
        %v922 = vrot.slane %v918, 3
        %v923 = vrot.slane %v919, 3
        %v926 = vadd.f32 %v914, %v922
        %v927 = vadd.f32 %v915, %v923
        %s928 = sld [smem:[#allocation6 + $0xb]]
        %v929 = vstv %s928
        %v930 = vmul.f32 %v929, %v607
        %v931 = vmul.f32 %v929, %v608
        %v934 = vrot.slane %v930, 4
        %v935 = vrot.slane %v931, 4
        %v938 = vadd.f32 %v926, %v934
        %v939 = vadd.f32 %v927, %v935
        %s940 = sld [smem:[#allocation6 + $0xc]]
        %v941 = vstv %s940
        %v942 = vmul.f32 %v941, %v622
        %v943 = vmul.f32 %v941, %v623
        %v946 = vrot.slane %v942, 5
        %v947 = vrot.slane %v943, 5
        %v950 = vadd.f32 %v938, %v946
        %v951 = vadd.f32 %v939, %v947
        %s952 = sld [smem:[#allocation6 + $0xd]]
        %v953 = vstv %s952
        %v954 = vmul.f32 %v953, %v637
        %v955 = vmul.f32 %v953, %v638
        %v958 = vrot.slane %v954, 6
        %v959 = vrot.slane %v955, 6
        %v962 = vadd.f32 %v950, %v958
        %v963 = vadd.f32 %v951, %v959
        %s964 = sld [smem:[#allocation6 + $0x38]]
        %v965 = vstv %s964
        %v966 = vmul.f32 %v965, %v645
        %v967 = vmul.f32 %v965, %v646
        %v968 = vadd.f32 %v962, %v966
        %v969 = vadd.f32 %v963, %v967
        %s970 = sld [smem:[#allocation6 + $0x39]]
        %v971 = vstv %s970
        %v972 = vmul.f32 %v971, %v659
        %v973 = vmul.f32 %v971, %v660
        %v976 = vrot.slane %v972, 1
        %v977 = vrot.slane %v973, 1
        %v980 = vadd.f32 %v968, %v976
        %v981 = vadd.f32 %v969, %v977
        %s982 = sld [smem:[#allocation6 + $0x3a]]
        %v983 = vstv %s982
        %v984 = vmul.f32 %v983, %v673
        %v985 = vmul.f32 %v983, %v674
        %v988 = vrot.slane %v984, 2
        %v989 = vrot.slane %v985, 2
        %v992 = vadd.f32 %v980, %v988
        %v993 = vadd.f32 %v981, %v989
        %s994 = sld [smem:[#allocation6 + $0x3b]]
        %v995 = vstv %s994
        %v996 = vmul.f32 %v995, %v675
        %v997 = vmul.f32 %v995, %v676
        %v1000 = vrot.slane %v996, 3
        %v1001 = vrot.slane %v997, 3
        %v1004 = vadd.f32 %v992, %v1000
        %v1005 = vadd.f32 %v993, %v1001
        %s1006 = sld [smem:[#allocation6 + $0x3c]]
        %v1007 = vstv %s1006
        %v1008 = vmul.f32 %v1007, %v689
        %v1009 = vmul.f32 %v1007, %v690
        %v1012 = vrot.slane %v1008, 4
        %v1013 = vrot.slane %v1009, 4
        %v1016 = vadd.f32 %v1004, %v1012
        %v1017 = vadd.f32 %v1005, %v1013
        %s1018 = sld [smem:[#allocation6 + $0x3d]]
        %v1019 = vstv %s1018
        %v1020 = vmul.f32 %v1019, %v703
        %v1021 = vmul.f32 %v1019, %v704
        %v1024 = vrot.slane %v1020, 5
        %v1025 = vrot.slane %v1021, 5
        %v1028 = vadd.f32 %v1016, %v1024
        %v1029 = vadd.f32 %v1017, %v1025
        %s1030 = sld [smem:[#allocation6 + $0x3e]]
        %v1031 = vstv %s1030
        %v1032 = vmul.f32 %v1031, %v717
        %v1033 = vmul.f32 %v1031, %v718
        %v1036 = vrot.slane %v1032, 6
        %v1037 = vrot.slane %v1033, 6
        %v1040 = vadd.f32 %v1028, %v1036
        %v1041 = vadd.f32 %v1029, %v1037
        %1042 = vrot.lane.b32.xlu0 %v1040, 32
        %v1043 = vpop.permute.xlu0 %1042
        %1044 = vrot.lane.b32.xlu0 %v1041, 32
        %v1045 = vpop.permute.xlu0 %1044
        %vm1046 = vcmp.lt.s32.totalorder %v556, 32
        %v1047 = vsel %vm1046, %v1043, %v1045
        %v1048 = vsel %vm1046, %v1045, %v1043
        %v1051 = vrot.slane %v1048, 7
        %v1052 = vrot.slane %v1047, 7
        %v1055 = vmul.f32 %v549, %v1051
        %v1056 = vmul.f32 %v550, %v1052
        %v1059 = vrot.slane %v1055, 1
        %v1060 = vrot.slane %v1056, 1
        %v1063 = vadd.f32 %v884, %v1059
        %v1064 = vadd.f32 %v885, %v1060
        %s1065 = sld [smem:[#allocation6 + $0xe]]
        %v1066 = vstv %s1065
        %v1067 = vmul.f32 %v1066, %v560
        %v1068 = vmul.f32 %v1066, %v561
        %v1069 = vadd.f32 %v1067, 0.0
        %v1070 = vadd.f32 %v1068, 0.0
        %s1071 = sld [smem:[#allocation6 + $0xf]]
        %v1072 = vstv %s1071
        %v1073 = vmul.f32 %v1072, %v575
        %v1074 = vmul.f32 %v1072, %v576
        %v1077 = vrot.slane %v1073, 1
        %v1078 = vrot.slane %v1074, 1
        %v1081 = vadd.f32 %v1069, %v1077
        %v1082 = vadd.f32 %v1070, %v1078
        %s1083 = sld [smem:[#allocation6 + $0x10]]
        %v1084 = vstv %s1083
        %v1085 = vmul.f32 %v1084, %v590
        %v1086 = vmul.f32 %v1084, %v591
        %v1089 = vrot.slane %v1085, 2
        %v1090 = vrot.slane %v1086, 2
        %v1093 = vadd.f32 %v1081, %v1089
        %v1094 = vadd.f32 %v1082, %v1090
        %s1095 = sld [smem:[#allocation6 + $0x11]]
        %v1096 = vstv %s1095
        %v1097 = vmul.f32 %v1096, %v592
        %v1098 = vmul.f32 %v1096, %v593
        %v1101 = vrot.slane %v1097, 3
        %v1102 = vrot.slane %v1098, 3
        %v1105 = vadd.f32 %v1093, %v1101
        %v1106 = vadd.f32 %v1094, %v1102
        %s1107 = sld [smem:[#allocation6 + $0x12]]
        %v1108 = vstv %s1107
        %v1109 = vmul.f32 %v1108, %v607
        %v1110 = vmul.f32 %v1108, %v608
        %v1113 = vrot.slane %v1109, 4
        %v1114 = vrot.slane %v1110, 4
        %v1117 = vadd.f32 %v1105, %v1113
        %v1118 = vadd.f32 %v1106, %v1114
        %s1119 = sld [smem:[#allocation6 + $0x13]]
        %v1120 = vstv %s1119
        %v1121 = vmul.f32 %v1120, %v622
        %v1122 = vmul.f32 %v1120, %v623
        %v1125 = vrot.slane %v1121, 5
        %v1126 = vrot.slane %v1122, 5
        %v1129 = vadd.f32 %v1117, %v1125
        %v1130 = vadd.f32 %v1118, %v1126
        %s1131 = sld [smem:[#allocation6 + $0x14]]
        %v1132 = vstv %s1131
        %v1133 = vmul.f32 %v1132, %v637
        %v1134 = vmul.f32 %v1132, %v638
        %v1137 = vrot.slane %v1133, 6
        %v1138 = vrot.slane %v1134, 6
        %v1141 = vadd.f32 %v1129, %v1137
        %v1142 = vadd.f32 %v1130, %v1138
        %s1143 = sld [smem:[#allocation6 + $0x3f]]
        %v1144 = vstv %s1143
        %v1145 = vmul.f32 %v1144, %v645
        %v1146 = vmul.f32 %v1144, %v646
        %v1147 = vadd.f32 %v1141, %v1145
        %v1148 = vadd.f32 %v1142, %v1146
        %s1149 = sld [smem:[#allocation6 + $0x40]]
        %v1150 = vstv %s1149
        %v1151 = vmul.f32 %v1150, %v659
        %v1152 = vmul.f32 %v1150, %v660
        %v1155 = vrot.slane %v1151, 1
        %v1156 = vrot.slane %v1152, 1
        %v1159 = vadd.f32 %v1147, %v1155
        %v1160 = vadd.f32 %v1148, %v1156
        %s1161 = sld [smem:[#allocation6 + $0x41]]
        %v1162 = vstv %s1161
        %v1163 = vmul.f32 %v1162, %v673
        %v1164 = vmul.f32 %v1162, %v674
        %v1167 = vrot.slane %v1163, 2
        %v1168 = vrot.slane %v1164, 2
        %v1171 = vadd.f32 %v1159, %v1167
        %v1172 = vadd.f32 %v1160, %v1168
        %s1173 = sld [smem:[#allocation6 + $0x42]]
        %v1174 = vstv %s1173
        %v1175 = vmul.f32 %v1174, %v675
        %v1176 = vmul.f32 %v1174, %v676
        %v1179 = vrot.slane %v1175, 3
        %v1180 = vrot.slane %v1176, 3
        %v1183 = vadd.f32 %v1171, %v1179
        %v1184 = vadd.f32 %v1172, %v1180
        %s1185 = sld [smem:[#allocation6 + $0x43]]
        %v1186 = vstv %s1185
        %v1187 = vmul.f32 %v1186, %v689
        %v1188 = vmul.f32 %v1186, %v690
        %v1191 = vrot.slane %v1187, 4
        %v1192 = vrot.slane %v1188, 4
        %v1195 = vadd.f32 %v1183, %v1191
        %v1196 = vadd.f32 %v1184, %v1192
        %s1197 = sld [smem:[#allocation6 + $0x44]]
        %v1198 = vstv %s1197
        %v1199 = vmul.f32 %v1198, %v703
        %v1200 = vmul.f32 %v1198, %v704
        %v1203 = vrot.slane %v1199, 5
        %v1204 = vrot.slane %v1200, 5
        %v1207 = vadd.f32 %v1195, %v1203
        %v1208 = vadd.f32 %v1196, %v1204
        %s1209 = sld [smem:[#allocation6 + $0x45]]
        %v1210 = vstv %s1209
        %v1211 = vmul.f32 %v1210, %v717
        %v1212 = vmul.f32 %v1210, %v718
        %v1215 = vrot.slane %v1211, 6
        %v1216 = vrot.slane %v1212, 6
        %v1219 = vadd.f32 %v1207, %v1215
        %v1220 = vadd.f32 %v1208, %v1216
        %1221 = vrot.lane.b32.xlu0 %v1219, 16
        %v1222 = vpop.permute.xlu0 %1221
        %1223 = vrot.lane.b32.xlu0 %v1220, 16
        %v1224 = vpop.permute.xlu0 %1223
        %vm1225 = vcmp.lt.s32.totalorder %v556, 16
        %v1226 = vsel %vm1225, %v1222, %v1224
        %v1227 = vsel %vm1225, %v1224, %v1222
        %v1230 = vrot.slane %v1227, 6
        %v1231 = vrot.slane %v1226, 6
        %v1234 = vmul.f32 %v549, %v1230
        %v1235 = vmul.f32 %v550, %v1231
        %v1238 = vrot.slane %v1234, 2
        %v1239 = vrot.slane %v1235, 2
        %v1242 = vadd.f32 %v1063, %v1238
        %v1243 = vadd.f32 %v1064, %v1239
        %s1244 = sld [smem:[#allocation6 + $0x15]]
        %v1245 = vstv %s1244
        %v1246 = vmul.f32 %v1245, %v560
        %v1247 = vmul.f32 %v1245, %v561
        %v1248 = vadd.f32 %v1246, 0.0
        %v1249 = vadd.f32 %v1247, 0.0
        %s1250 = sld [smem:[#allocation6 + $0x16]]
        %v1251 = vstv %s1250
        %v1252 = vmul.f32 %v1251, %v575
        %v1253 = vmul.f32 %v1251, %v576
        %v1256 = vrot.slane %v1252, 1
        %v1257 = vrot.slane %v1253, 1
        %v1260 = vadd.f32 %v1248, %v1256
        %v1261 = vadd.f32 %v1249, %v1257
        %s1262 = sld [smem:[#allocation6 + $0x17]]
        %v1263 = vstv %s1262
        %v1264 = vmul.f32 %v1263, %v590
        %v1265 = vmul.f32 %v1263, %v591
        %v1268 = vrot.slane %v1264, 2
        %v1269 = vrot.slane %v1265, 2
        %v1272 = vadd.f32 %v1260, %v1268
        %v1273 = vadd.f32 %v1261, %v1269
        %s1274 = sld [smem:[#allocation6 + $0x18]]
        %v1275 = vstv %s1274
        %v1276 = vmul.f32 %v1275, %v592
        %v1277 = vmul.f32 %v1275, %v593
        %v1280 = vrot.slane %v1276, 3
        %v1281 = vrot.slane %v1277, 3
        %v1284 = vadd.f32 %v1272, %v1280
        %v1285 = vadd.f32 %v1273, %v1281
        %s1286 = sld [smem:[#allocation6 + $0x19]]
        %v1287 = vstv %s1286
        %v1288 = vmul.f32 %v1287, %v607
        %v1289 = vmul.f32 %v1287, %v608
        %v1292 = vrot.slane %v1288, 4
        %v1293 = vrot.slane %v1289, 4
        %v1296 = vadd.f32 %v1284, %v1292
        %v1297 = vadd.f32 %v1285, %v1293
        %s1298 = sld [smem:[#allocation6 + $0x1a]]
        %v1299 = vstv %s1298
        %v1300 = vmul.f32 %v1299, %v622
        %v1301 = vmul.f32 %v1299, %v623
        %v1304 = vrot.slane %v1300, 5
        %v1305 = vrot.slane %v1301, 5
        %v1308 = vadd.f32 %v1296, %v1304
        %v1309 = vadd.f32 %v1297, %v1305
        %s1310 = sld [smem:[#allocation6 + $0x1b]]
        %v1311 = vstv %s1310
        %v1312 = vmul.f32 %v1311, %v637
        %v1313 = vmul.f32 %v1311, %v638
        %v1316 = vrot.slane %v1312, 6
        %v1317 = vrot.slane %v1313, 6
        %v1320 = vadd.f32 %v1308, %v1316
        %v1321 = vadd.f32 %v1309, %v1317
        %s1322 = sld [smem:[#allocation6 + $0x46]]
        %v1323 = vstv %s1322
        %v1324 = vmul.f32 %v1323, %v645
        %v1325 = vmul.f32 %v1323, %v646
        %v1326 = vadd.f32 %v1320, %v1324
        %v1327 = vadd.f32 %v1321, %v1325
        %s1328 = sld [smem:[#allocation6 + $0x47]]
        %v1329 = vstv %s1328
        %v1330 = vmul.f32 %v1329, %v659
        %v1331 = vmul.f32 %v1329, %v660
        %v1334 = vrot.slane %v1330, 1
        %v1335 = vrot.slane %v1331, 1
        %v1338 = vadd.f32 %v1326, %v1334
        %v1339 = vadd.f32 %v1327, %v1335
        %s1340 = sld [smem:[#allocation6 + $0x48]]
        %v1341 = vstv %s1340
        %v1342 = vmul.f32 %v1341, %v673
        %v1343 = vmul.f32 %v1341, %v674
        %v1346 = vrot.slane %v1342, 2
        %v1347 = vrot.slane %v1343, 2
        %v1350 = vadd.f32 %v1338, %v1346
        %v1351 = vadd.f32 %v1339, %v1347
        %s1352 = sld [smem:[#allocation6 + $0x49]]
        %v1353 = vstv %s1352
        %v1354 = vmul.f32 %v1353, %v675
        %v1355 = vmul.f32 %v1353, %v676
        %v1358 = vrot.slane %v1354, 3
        %v1359 = vrot.slane %v1355, 3
        %v1362 = vadd.f32 %v1350, %v1358
        %v1363 = vadd.f32 %v1351, %v1359
        %s1364 = sld [smem:[#allocation6 + $0x4a]]
        %v1365 = vstv %s1364
        %v1366 = vmul.f32 %v1365, %v689
        %v1367 = vmul.f32 %v1365, %v690
        %v1370 = vrot.slane %v1366, 4
        %v1371 = vrot.slane %v1367, 4
        %v1374 = vadd.f32 %v1362, %v1370
        %v1375 = vadd.f32 %v1363, %v1371
        %s1376 = sld [smem:[#allocation6 + $0x4b]]
        %v1377 = vstv %s1376
        %v1378 = vmul.f32 %v1377, %v703
        %v1379 = vmul.f32 %v1377, %v704
        %v1382 = vrot.slane %v1378, 5
        %v1383 = vrot.slane %v1379, 5
        %v1386 = vadd.f32 %v1374, %v1382
        %v1387 = vadd.f32 %v1375, %v1383
        %s1388 = sld [smem:[#allocation6 + $0x4c]]
        %v1389 = vstv %s1388
        %v1390 = vmul.f32 %v1389, %v717
        %v1391 = vmul.f32 %v1389, %v718
        %v1394 = vrot.slane %v1390, 6
        %v1395 = vrot.slane %v1391, 6
        %v1398 = vadd.f32 %v1386, %v1394
        %v1399 = vadd.f32 %v1387, %v1395
        %v1402 = vrot.slane %v1398, 5
        %v1403 = vrot.slane %v1399, 5
        %v1406 = vmul.f32 %v549, %v1402
        %v1407 = vmul.f32 %v550, %v1403
        %v1410 = vrot.slane %v1406, 3
        %v1411 = vrot.slane %v1407, 3
        %v1414 = vadd.f32 %v1242, %v1410
        %v1415 = vadd.f32 %v1243, %v1411
        %s1416 = sld [smem:[#allocation6 + $0x1c]]
        %v1417 = vstv %s1416
        %v1418 = vmul.f32 %v1417, %v560
        %v1419 = vmul.f32 %v1417, %v561
        %v1420 = vadd.f32 %v1418, 0.0
        %v1421 = vadd.f32 %v1419, 0.0
        %s1422 = sld [smem:[#allocation6 + $0x1d]]
        %v1423 = vstv %s1422
        %v1424 = vmul.f32 %v1423, %v575
        %v1425 = vmul.f32 %v1423, %v576
        %v1428 = vrot.slane %v1424, 1
        %v1429 = vrot.slane %v1425, 1
        %v1432 = vadd.f32 %v1420, %v1428
        %v1433 = vadd.f32 %v1421, %v1429
        %s1434 = sld [smem:[#allocation6 + $0x1e]]
        %v1435 = vstv %s1434
        %v1436 = vmul.f32 %v1435, %v590
        %v1437 = vmul.f32 %v1435, %v591
        %v1440 = vrot.slane %v1436, 2
        %v1441 = vrot.slane %v1437, 2
        %v1444 = vadd.f32 %v1432, %v1440
        %v1445 = vadd.f32 %v1433, %v1441
        %s1446 = sld [smem:[#allocation6 + $0x1f]]
        %v1447 = vstv %s1446
        %v1448 = vmul.f32 %v1447, %v592
        %v1449 = vmul.f32 %v1447, %v593
        %v1452 = vrot.slane %v1448, 3
        %v1453 = vrot.slane %v1449, 3
        %v1456 = vadd.f32 %v1444, %v1452
        %v1457 = vadd.f32 %v1445, %v1453
        %s1458 = sld [smem:[#allocation6 + $0x20]]
        %v1459 = vstv %s1458
        %v1460 = vmul.f32 %v1459, %v607
        %v1461 = vmul.f32 %v1459, %v608
        %v1464 = vrot.slane %v1460, 4
        %v1465 = vrot.slane %v1461, 4
        %v1468 = vadd.f32 %v1456, %v1464
        %v1469 = vadd.f32 %v1457, %v1465
        %s1470 = sld [smem:[#allocation6 + $0x21]]
        %v1471 = vstv %s1470
        %v1472 = vmul.f32 %v1471, %v622
        %v1473 = vmul.f32 %v1471, %v623
        %v1476 = vrot.slane %v1472, 5
        %v1477 = vrot.slane %v1473, 5
        %v1480 = vadd.f32 %v1468, %v1476
        %v1481 = vadd.f32 %v1469, %v1477
        %s1482 = sld [smem:[#allocation6 + $0x22]]
        %v1483 = vstv %s1482
        %v1484 = vmul.f32 %v1483, %v637
        %v1485 = vmul.f32 %v1483, %v638
        %v1488 = vrot.slane %v1484, 6
        %v1489 = vrot.slane %v1485, 6
        %v1492 = vadd.f32 %v1480, %v1488
        %v1493 = vadd.f32 %v1481, %v1489
        %s1494 = sld [smem:[#allocation6 + $0x4d]]
        %v1495 = vstv %s1494
        %v1496 = vmul.f32 %v1495, %v645
        %v1497 = vmul.f32 %v1495, %v646
        %v1498 = vadd.f32 %v1492, %v1496
        %v1499 = vadd.f32 %v1493, %v1497
        %s1500 = sld [smem:[#allocation6 + $0x4e]]
        %v1501 = vstv %s1500
        %v1502 = vmul.f32 %v1501, %v659
        %v1503 = vmul.f32 %v1501, %v660
        %v1506 = vrot.slane %v1502, 1
        %v1507 = vrot.slane %v1503, 1
        %v1510 = vadd.f32 %v1498, %v1506
        %v1511 = vadd.f32 %v1499, %v1507
        %s1512 = sld [smem:[#allocation6 + $0x4f]]
        %v1513 = vstv %s1512
        %v1514 = vmul.f32 %v1513, %v673
        %v1515 = vmul.f32 %v1513, %v674
        %v1518 = vrot.slane %v1514, 2
        %v1519 = vrot.slane %v1515, 2
        %v1522 = vadd.f32 %v1510, %v1518
        %v1523 = vadd.f32 %v1511, %v1519
        %s1524 = sld [smem:[#allocation6 + $0x50]]
        %v1525 = vstv %s1524
        %v1526 = vmul.f32 %v1525, %v675
        %v1527 = vmul.f32 %v1525, %v676
        %v1530 = vrot.slane %v1526, 3
        %v1531 = vrot.slane %v1527, 3
        %v1534 = vadd.f32 %v1522, %v1530
        %v1535 = vadd.f32 %v1523, %v1531
        %s1536 = sld [smem:[#allocation6 + $0x51]]
        %v1537 = vstv %s1536
        %v1538 = vmul.f32 %v1537, %v689
        %v1539 = vmul.f32 %v1537, %v690
        %v1542 = vrot.slane %v1538, 4
        %v1543 = vrot.slane %v1539, 4
        %v1546 = vadd.f32 %v1534, %v1542
        %v1547 = vadd.f32 %v1535, %v1543
        %s1548 = sld [smem:[#allocation6 + $0x52]]
        %v1549 = vstv %s1548
        %v1550 = vmul.f32 %v1549, %v703
        %v1551 = vmul.f32 %v1549, %v704
        %v1554 = vrot.slane %v1550, 5
        %v1555 = vrot.slane %v1551, 5
        %v1558 = vadd.f32 %v1546, %v1554
        %v1559 = vadd.f32 %v1547, %v1555
        %s1560 = sld [smem:[#allocation6 + $0x53]]
        %v1561 = vstv %s1560
        %v1562 = vmul.f32 %v1561, %v717
        %v1563 = vmul.f32 %v1561, %v718
        %v1566 = vrot.slane %v1562, 6
        %v1567 = vrot.slane %v1563, 6
        %v1570 = vadd.f32 %v1558, %v1566
        %v1571 = vadd.f32 %v1559, %v1567
        %1572 = vrot.lane.b32.xlu0 %v1570, 112
        %v1573 = vpop.permute.xlu0 %1572
        %1574 = vrot.lane.b32.xlu0 %v1571, 112
        %v1575 = vpop.permute.xlu0 %1574
        %vm1576 = vcmp.lt.s32.totalorder %v556, 112
        %v1577 = vsel %vm1576, %v1573, %v1575
        %v1578 = vsel %vm1576, %v1575, %v1573
        %v1581 = vrot.slane %v1577, 4
        %v1582 = vrot.slane %v1578, 4
        %v1585 = vmul.f32 %v549, %v1581
        %v1586 = vmul.f32 %v550, %v1582
        %v1589 = vrot.slane %v1585, 4
        %v1590 = vrot.slane %v1586, 4
        %v1593 = vadd.f32 %v1414, %v1589
        %v1594 = vadd.f32 %v1415, %v1590
        %s1595 = sld [smem:[#allocation6 + $0x23]]
        %v1596 = vstv %s1595
        %v1597 = vmul.f32 %v1596, %v560
        %v1598 = vmul.f32 %v1596, %v561
        %v1599 = vadd.f32 %v1597, 0.0
        %v1600 = vadd.f32 %v1598, 0.0
        %s1601 = sld [smem:[#allocation6 + $0x24]]
        %v1602 = vstv %s1601
        %v1603 = vmul.f32 %v1602, %v575
        %v1604 = vmul.f32 %v1602, %v576
        %v1607 = vrot.slane %v1603, 1
        %v1608 = vrot.slane %v1604, 1
        %v1611 = vadd.f32 %v1599, %v1607
        %v1612 = vadd.f32 %v1600, %v1608
        %s1613 = sld [smem:[#allocation6 + $0x25]]
        %v1614 = vstv %s1613
        %v1615 = vmul.f32 %v1614, %v590
        %v1616 = vmul.f32 %v1614, %v591
        %v1619 = vrot.slane %v1615, 2
        %v1620 = vrot.slane %v1616, 2
        %v1623 = vadd.f32 %v1611, %v1619
        %v1624 = vadd.f32 %v1612, %v1620
        %s1625 = sld [smem:[#allocation6 + $0x26]]
        %v1626 = vstv %s1625
        %v1627 = vmul.f32 %v1626, %v592
        %v1628 = vmul.f32 %v1626, %v593
        %v1631 = vrot.slane %v1627, 3
        %v1632 = vrot.slane %v1628, 3
        %v1635 = vadd.f32 %v1623, %v1631
        %v1636 = vadd.f32 %v1624, %v1632
        %s1637 = sld [smem:[#allocation6 + $0x27]]
        %v1638 = vstv %s1637
        %v1639 = vmul.f32 %v1638, %v607
        %v1640 = vmul.f32 %v1638, %v608
        %v1643 = vrot.slane %v1639, 4
        %v1644 = vrot.slane %v1640, 4
        %v1647 = vadd.f32 %v1635, %v1643
        %v1648 = vadd.f32 %v1636, %v1644
        %s1649 = sld [smem:[#allocation6 + $0x28]]
        %v1650 = vstv %s1649
        %v1651 = vmul.f32 %v1650, %v622
        %v1652 = vmul.f32 %v1650, %v623
        %v1655 = vrot.slane %v1651, 5
        %v1656 = vrot.slane %v1652, 5
        %v1659 = vadd.f32 %v1647, %v1655
        %v1660 = vadd.f32 %v1648, %v1656
        %s1661 = sld [smem:[#allocation6 + $0x29]]
        %v1662 = vstv %s1661
        %v1663 = vmul.f32 %v1662, %v637
        %v1664 = vmul.f32 %v1662, %v638
        %v1667 = vrot.slane %v1663, 6
        %v1668 = vrot.slane %v1664, 6
        %v1671 = vadd.f32 %v1659, %v1667
        %v1672 = vadd.f32 %v1660, %v1668
        %s1673 = sld [smem:[#allocation6 + $0x54]]
        %v1674 = vstv %s1673
        %v1675 = vmul.f32 %v1674, %v645
        %v1676 = vmul.f32 %v1674, %v646
        %v1677 = vadd.f32 %v1671, %v1675
        %v1678 = vadd.f32 %v1672, %v1676
        %s1679 = sld [smem:[#allocation6 + $0x55]]
        %v1680 = vstv %s1679
        %v1681 = vmul.f32 %v1680, %v659
        %v1682 = vmul.f32 %v1680, %v660
        %v1685 = vrot.slane %v1681, 1
        %v1686 = vrot.slane %v1682, 1
        %v1689 = vadd.f32 %v1677, %v1685
        %v1690 = vadd.f32 %v1678, %v1686
        %s1691 = sld [smem:[#allocation6 + $0x56]]
        %v1692 = vstv %s1691
        %v1693 = vmul.f32 %v1692, %v673
        %v1694 = vmul.f32 %v1692, %v674
        %v1697 = vrot.slane %v1693, 2
        %v1698 = vrot.slane %v1694, 2
        %v1701 = vadd.f32 %v1689, %v1697
        %v1702 = vadd.f32 %v1690, %v1698
        %s1703 = sld [smem:[#allocation6 + $0x57]]
        %v1704 = vstv %s1703
        %v1705 = vmul.f32 %v1704, %v675
        %v1706 = vmul.f32 %v1704, %v676
        %v1709 = vrot.slane %v1705, 3
        %v1710 = vrot.slane %v1706, 3
        %v1713 = vadd.f32 %v1701, %v1709
        %v1714 = vadd.f32 %v1702, %v1710
        %s1715 = sld [smem:[#allocation6 + $0x58]]
        %v1716 = vstv %s1715
        %v1717 = vmul.f32 %v1716, %v689
        %v1718 = vmul.f32 %v1716, %v690
        %v1721 = vrot.slane %v1717, 4
        %v1722 = vrot.slane %v1718, 4
        %v1725 = vadd.f32 %v1713, %v1721
        %v1726 = vadd.f32 %v1714, %v1722
        %s1727 = sld [smem:[#allocation6 + $0x59]]
        %v1728 = vstv %s1727
        %v1729 = vmul.f32 %v1728, %v703
        %v1730 = vmul.f32 %v1728, %v704
        %v1733 = vrot.slane %v1729, 5
        %v1734 = vrot.slane %v1730, 5
        %v1737 = vadd.f32 %v1725, %v1733
        %v1738 = vadd.f32 %v1726, %v1734
        %s1739 = sld [smem:[#allocation6 + $0x5a]]
        %v1740 = vstv %s1739
        %v1741 = vmul.f32 %v1740, %v717
        %v1742 = vmul.f32 %v1740, %v718
        %v1745 = vrot.slane %v1741, 6
        %v1746 = vrot.slane %v1742, 6
        %v1749 = vadd.f32 %v1737, %v1745
        %v1750 = vadd.f32 %v1738, %v1746
        %1751 = vrot.lane.b32.xlu0 %v1749, 96
        %v1752 = vpop.permute.xlu0 %1751
        %1753 = vrot.lane.b32.xlu0 %v1750, 96
        %v1754 = vpop.permute.xlu0 %1753
        %vm1755 = vcmp.lt.s32.totalorder %v556, 96
        %v1756 = vsel %vm1755, %v1752, %v1754
        %v1757 = vsel %vm1755, %v1754, %v1752
        %v1760 = vrot.slane %v1756, 3
        %v1761 = vrot.slane %v1757, 3
        %v1764 = vmul.f32 %v549, %v1760
        %v1765 = vmul.f32 %v550, %v1761
        %v1768 = vrot.slane %v1764, 5
        %v1769 = vrot.slane %v1765, 5
        %v1772 = vadd.f32 %v1593, %v1768
        %v1773 = vadd.f32 %v1594, %v1769
        %s1774 = sld [smem:[#allocation6 + $0x2a]]
        %v1775 = vstv %s1774
        %v1776 = vmul.f32 %v1775, %v560
        %v1777 = vmul.f32 %v1775, %v561
        %v1778 = vadd.f32 %v1776, 0.0
        %v1779 = vadd.f32 %v1777, 0.0
        %s1780 = sld [smem:[#allocation6 + $0x2b]]
        %v1781 = vstv %s1780
        %v1782 = vmul.f32 %v1781, %v575
        %v1783 = vmul.f32 %v1781, %v576
        %v1786 = vrot.slane %v1782, 1
        %v1787 = vrot.slane %v1783, 1
        %v1790 = vadd.f32 %v1778, %v1786
        %v1791 = vadd.f32 %v1779, %v1787
        %s1792 = sld [smem:[#allocation6 + $0x2c]]
        %v1793 = vstv %s1792
        %v1794 = vmul.f32 %v1793, %v590
        %v1795 = vmul.f32 %v1793, %v591
        %v1798 = vrot.slane %v1794, 2
        %v1799 = vrot.slane %v1795, 2
        %v1802 = vadd.f32 %v1790, %v1798
        %v1803 = vadd.f32 %v1791, %v1799
        %s1804 = sld [smem:[#allocation6 + $0x2d]]
        %v1805 = vstv %s1804
        %v1806 = vmul.f32 %v1805, %v592
        %v1807 = vmul.f32 %v1805, %v593
        %v1810 = vrot.slane %v1806, 3
        %v1811 = vrot.slane %v1807, 3
        %v1814 = vadd.f32 %v1802, %v1810
        %v1815 = vadd.f32 %v1803, %v1811
        %s1816 = sld [smem:[#allocation6 + $0x2e]]
        %v1817 = vstv %s1816
        %v1818 = vmul.f32 %v1817, %v607
        %v1819 = vmul.f32 %v1817, %v608
        %v1822 = vrot.slane %v1818, 4
        %v1823 = vrot.slane %v1819, 4
        %v1826 = vadd.f32 %v1814, %v1822
        %v1827 = vadd.f32 %v1815, %v1823
        %s1828 = sld [smem:[#allocation6 + $0x2f]]
        %v1829 = vstv %s1828
        %v1830 = vmul.f32 %v1829, %v622
        %v1831 = vmul.f32 %v1829, %v623
        %v1834 = vrot.slane %v1830, 5
        %v1835 = vrot.slane %v1831, 5
        %v1838 = vadd.f32 %v1826, %v1834
        %v1839 = vadd.f32 %v1827, %v1835
        %s1840 = sld [smem:[#allocation6 + $0x30]]
        %v1841 = vstv %s1840
        %v1842 = vmul.f32 %v1841, %v637
        %v1843 = vmul.f32 %v1841, %v638
        %v1846 = vrot.slane %v1842, 6
        %v1847 = vrot.slane %v1843, 6
        %v1850 = vadd.f32 %v1838, %v1846
        %v1851 = vadd.f32 %v1839, %v1847
        %s1852 = sld [smem:[#allocation6 + $0x5b]]
        %v1853 = vstv %s1852
        %v1854 = vmul.f32 %v1853, %v645
        %v1855 = vmul.f32 %v1853, %v646
        %v1856 = vadd.f32 %v1850, %v1854
        %v1857 = vadd.f32 %v1851, %v1855
        %s1858 = sld [smem:[#allocation6 + $0x5c]]
        %v1859 = vstv %s1858
        %v1860 = vmul.f32 %v1859, %v659
        %v1861 = vmul.f32 %v1859, %v660
        %v1864 = vrot.slane %v1860, 1
        %v1865 = vrot.slane %v1861, 1
        %v1868 = vadd.f32 %v1856, %v1864
        %v1869 = vadd.f32 %v1857, %v1865
        %s1870 = sld [smem:[#allocation6 + $0x5d]]
        %v1871 = vstv %s1870
        %v1872 = vmul.f32 %v1871, %v673
        %v1873 = vmul.f32 %v1871, %v674
        %v1876 = vrot.slane %v1872, 2
        %v1877 = vrot.slane %v1873, 2
        %v1880 = vadd.f32 %v1868, %v1876
        %v1881 = vadd.f32 %v1869, %v1877
        %s1882 = sld [smem:[#allocation6 + $0x5e]]
        %v1883 = vstv %s1882
        %v1884 = vmul.f32 %v1883, %v675
        %v1885 = vmul.f32 %v1883, %v676
        %v1888 = vrot.slane %v1884, 3
        %v1889 = vrot.slane %v1885, 3
        %v1892 = vadd.f32 %v1880, %v1888
        %v1893 = vadd.f32 %v1881, %v1889
        %s1894 = sld [smem:[#allocation6 + $0x5f]]
        %v1895 = vstv %s1894
        %v1896 = vmul.f32 %v1895, %v689
        %v1897 = vmul.f32 %v1895, %v690
        %v1900 = vrot.slane %v1896, 4
        %v1901 = vrot.slane %v1897, 4
        %v1904 = vadd.f32 %v1892, %v1900
        %v1905 = vadd.f32 %v1893, %v1901
        %s1906 = sld [smem:[#allocation6 + $0x60]]
        %v1907 = vstv %s1906
        %v1908 = vmul.f32 %v1907, %v703
        %v1909 = vmul.f32 %v1907, %v704
        %v1912 = vrot.slane %v1908, 5
        %v1913 = vrot.slane %v1909, 5
        %v1916 = vadd.f32 %v1904, %v1912
        %v1917 = vadd.f32 %v1905, %v1913
        %s1918 = sld [smem:[#allocation6 + $0x61]]
        %v1919 = vstv %s1918
        %v1920 = vmul.f32 %v1919, %v717
        %v1921 = vmul.f32 %v1919, %v718
        %v1924 = vrot.slane %v1920, 6
        %v1925 = vrot.slane %v1921, 6
        %v1928 = vadd.f32 %v1916, %v1924
        %v1929 = vadd.f32 %v1917, %v1925
        %1930 = vrot.lane.b32.xlu0 %v1928, 80
        %v1931 = vpop.permute.xlu0 %1930
        %1932 = vrot.lane.b32.xlu0 %v1929, 80
        %v1933 = vpop.permute.xlu0 %1932
        %vm1934 = vcmp.lt.s32.totalorder %v556, 80
        %v1935 = vsel %vm1934, %v1931, %v1933
        %v1936 = vsel %vm1934, %v1933, %v1931
        %v1939 = vrot.slane %v1935, 2
        %v1940 = vrot.slane %v1936, 2
        %v1943 = vmul.f32 %v549, %v1939
        %v1944 = vmul.f32 %v550, %v1940
        %v1947 = vrot.slane %v1943, 6
        %v1948 = vrot.slane %v1944, 6
        %v1951 = vadd.f32 %v1772, %v1947
        %v1952 = vadd.f32 %v1773, %v1948
        %v1953 = vxor.u32 %v1951, 2147483648
        %v1954 = vxor.u32 %v1952, 2147483648
        %v1955 = vmul.f32 %v1953, 1.442695
        %v1956 = vpow.pop %v1955
        %v1957 = vmul.f32 %v1954, 1.442695
        %v1958 = vpow.pop %v1957
        %v1959 = vadd.f32 %v1956, 1.0
        %v1960 = vadd.f32 %v1958, 1.0
        %v1961 = vrcp.pop %v1959
        %v1962 = vmul.f32 %v1959, %v1961
        %v1963 = vsub.f32 1.0, %v1962
        %v1964 = vmul.f32 %v1961, %v1963
        %v1965 = vadd.f32 %v1961, %v1964
        %vm1966 = vweird.f32 %v1959
        %vm1967 = vweird.f32 %v1961
        %vm1968 = vmor %vm1966, %vm1967
        %v1969 = vsel %vm1968, %v1961, %v1965
        %v1970 = vand.u32 2147483647, %v1959
        %vm1971 = vcmp.eq.f32.partialorder %v1970, 8.507059e+37
        %v1972 = vand.u32 %v1959, 2147483648
        %v1973 = vor.u32 1.1754944e-38, %v1972
        %v1974 = vsel %vm1971, %v1973, %v1969
        %v1975 = vmul.f32 1.0, %v1974
        %v1976 = vrcp.pop %v1960
        %v1977 = vmul.f32 %v1960, %v1976
        %v1978 = vsub.f32 1.0, %v1977
        %v1979 = vmul.f32 %v1976, %v1978
        %v1980 = vadd.f32 %v1976, %v1979
        %vm1981 = vweird.f32 %v1960
        %vm1982 = vweird.f32 %v1976
        %vm1983 = vmor %vm1981, %vm1982
        %v1984 = vsel %vm1983, %v1976, %v1980
        %v1985 = vand.u32 2147483647, %v1960
        %vm1986 = vcmp.eq.f32.partialorder %v1985, 8.507059e+37
        %v1987 = vand.u32 %v1960, 2147483648
        %v1988 = vor.u32 1.1754944e-38, %v1987
        %v1989 = vsel %vm1986, %v1988, %v1984
        %v1990 = vmul.f32 1.0, %v1989
        %v1991 = vld [vmem:[%s285] sm:$0xff]
        %v1992 = vld [vmem:[%s285 + $0x8] sm:$0xff]
        %v1993 = vld [vmem:[%s285 + $0x10] sm:$0xff]
        %v1994 = vld [vmem:[%s285 + $0x18] sm:$0xff]
        %v1995 = vld [vmem:[%s285 + $0x20] sm:$0xff]
        %v1996 = vld [vmem:[%s285 + $0x28] sm:$0xff]
        %v1997 = vld [vmem:[%s285 + $0x30] sm:$0xff]
        %v1998 = vld [vmem:[%s285 + $0x38] sm:$0xff]
        %v1999 = vperm.slane %v1975, 0
        %v2000 = vperm.slane %v1990, 0
        %v2001 = vmul.f32 %v1991, %v1999
        %v2002 = vmul.f32 %v1992, %v2000
        %v2003 = vmul.f32 %v1993, %v1999
        %v2004 = vmul.f32 %v1994, %v2000
        %v2005 = vmul.f32 %v1995, %v1999
        %v2006 = vmul.f32 %v1996, %v2000
        %v2007 = vmul.f32 %v1997, %v1999
        %v2008 = vmul.f32 %v1998, %v2000
        %2009 = vst [vmem:[%s285] sm:$0xff] %v2001
        %2010 = vst [vmem:[%s285 + $0x8] sm:$0xff] %v2002
        %2011 = vst [vmem:[%s285 + $0x10] sm:$0xff] %v2003
        %2012 = vst [vmem:[%s285 + $0x18] sm:$0xff] %v2004
        %2013 = vst [vmem:[%s285 + $0x20] sm:$0xff] %v2005
        %2014 = vst [vmem:[%s285 + $0x28] sm:$0xff] %v2006
        %2015 = vst [vmem:[%s285 + $0x30] sm:$0xff] %v2007
        %2016 = vst [vmem:[%s285 + $0x38] sm:$0xff] %v2008
        %s2017 = sand.u32 %s163, 1
        %s2018 = scalar_lea.sflag [#allocation4], %s2017
        %s2019 = sand.u32 %s163, 1
        %s2020 = smul.addr %s2019, 64
        %s2021 = scalar_lea.vmem [#allocation7], %s2020
        // Predicated region
        $region53: #{tpu_custom_call.1} parent=43 // pred_check
          %p2022 = pneg %p173
        $region54: #{tpu_custom_call.1} parent=43 // pred_check_branch
          %2024 = sbr.rel (%p2022) target = $region56
        $region55: #{tpu_custom_call.1} parent=43 // pred_region
          %2026 = vsyncadd %s2018, 0
          %s2027 = smul.addr %s24, 8
          %s2028 = smul.addr %s2027, 8
          %s2029 = scalar_lea.hbm %s6, %s2028
          %s2030 = sshll.u32 %s2021, 4
          %s2031 = int_to_ptr.vmem [resolvable:$true] %s2030
          %s2032 = sshll.u32 %s2029, 4
          %s2033 = int_to_ptr.hbm [resolvable:$true] %s2032
          %2038 = dma.vmem_to_hbm [thread:$0]  %s2031, 1024, %s2033, %s2018, 256, 256, 16
        $region56: #{tpu_custom_call.1} parent=43 // pred_fallthru
          _
      $region44: #{tpu_custom_call.1} parent=5 // pred_fallthru
        _
      %p2039 = scmp.le.s32.totalorder 2, %s19
      // Predicated region
      $region57: #{tpu_custom_call.1} parent=5 // pred_check
        %p2040 = pneg %p2039
      $region58: #{tpu_custom_call.1} parent=5 // pred_check_branch
        %2042 = sbr.rel (%p2040) target = $region60
      $region59: #{tpu_custom_call.1} parent=5 // pred_region
        %s2043 = ssub.s32 %s19, 2
        // Predicated region
        $region61: #{tpu_custom_call.1} parent=59 // pred_check
          %p2044 = pneg %p179
        $region62: #{tpu_custom_call.1} parent=59 // pred_check_branch
          %2046 = sbr.rel (%p2044) target = $region64
        $region63: #{tpu_custom_call.1} parent=59 // pred_region
          %s2047 = sand.u32 %s164, 1
          %s2048 = scalar_lea.sflag [#allocation4], %s2047
          %s2049 = sand.u32 %s164, 1
          %s2050 = smul.addr %s2049, 64
          %s2051 = scalar_lea.vmem [#allocation7], %s2050
          %2053 = dma.done %s2048, 1024
        $region64: #{tpu_custom_call.1} parent=59 // pred_fallthru
          _
      $region60: #{tpu_custom_call.1} parent=5 // pred_fallthru
        _
    $region6: #{tpu_custom_call.1} parent=1 // loop_footer
      %s23 = sadd.s32 1, %s19
    $region7: #{tpu_custom_call.1} parent=1 // loop_footer_branch
      %18 = sbr.rel target = $region3
    $region8: #{tpu_custom_call.1} parent=1 // loop_exit
      _
    %2054 = vsyncpa [#allocation3], 1
    %s2055 = scalar_lea.sflag [#allocation3], 1
    %2056 = vsyncpa %s2055, 1
    %2057 = vsyncpa [#allocation4], 1
    %s2058 = scalar_lea.sflag [#allocation4], 1
    %2059 = vsyncpa %s2058, 1
    %2060 = vsyncpa [#allocation5], 1
    %s2061 = scalar_lea.sflag [#allocation5], 1
    %2062 = vsyncpa %s2061, 1

</llo_original>
